<compile_context>
chip_gen: v7x
topology: tpu7x:2x2x1
jax: 0.10.0
libtpu: 0.0.40
codegen_flags: <defaults>
</compile_context>

<pallas_src>
import math
import numpy as np
import jax
import jax.numpy as jnp
from jax.experimental import pallas as pl
from jax.experimental.pallas import tpu as pltpu

# ----------------------------- config (small, consistent with the module) -----
IMG = 16          # img_size
PATCH = 4         # patch_size
CIN = 3           # in_chans
DIM = 32          # embed_dim
DEPTH = 2         # depth
MLP_RATIO = 4.0
HID = int(DIM * MLP_RATIO)        # 128
NUM_CLASSES = 10
BATCH = 2

GH = IMG // PATCH                 # spatial grid side (a = b)
NTOK = GH * GH                    # num_patches N
FH = GH                           # GlobalFilter h
FW = GH // 2 + 1                  # GlobalFilter w
NFREQ = FH * FW                   # retained complex frequencies
FPAD = ((NFREQ + 7) // 8) * 8     # sublane-aligned padded frequency count
CPP = CIN * PATCH * PATCH         # flattened patch length
HEAD_PAD = 128                    # lane-dense classifier / output width
INV_SQRT2 = 0.7071067811865476
LN_EPS = 1e-6


# ----------------------------- Pallas kernel ---------------------------------
def gfnet_kernel(xp_ref, pe_w_ref, pos_ref, dft_ref, idft_ref,
                 ln1_w_ref, ln1_b_ref, wre_ref, wim_ref,
                 ln2_w_ref, ln2_b_ref,
                 fc1_w_ref, fc1_b_ref, fc2_w_ref, fc2_b_ref,
                 lnf_w_ref, lnf_b_ref, head_w_ref, head_b_ref,
                 out_ref):
    depth = ln1_w_ref.shape[0]
    fpad = wre_ref.shape[1]

    def layernorm(x, w, b):
        mu = jnp.mean(x, axis=-1, keepdims=True)
        var = jnp.mean((x - mu) ** 2, axis=-1, keepdims=True)
        return (x - mu) * jax.lax.rsqrt(var + LN_EPS) * w[None, :] + b[None, :]

    def gelu(x):  # exact (erf) GELU, matching torch.nn.GELU default
        return 0.5 * x * (1.0 + jax.lax.erf(x * jnp.float32(INV_SQRT2)))

    # ---- patch embedding for this image: (N, Cpp) @ (Cpp, D) + (pos + bias) ----
    x = jnp.dot(xp_ref[0], pe_w_ref[...], preferred_element_type=jnp.float32)
    x = x + pos_ref[...]                                   # (N, D)

    dft = dft_ref[...]      # (2*FPAD, N)  stacked [DFT_re ; DFT_im] (zero-padded)
    idft = idft_ref[...]    # (N, 2*FPAD)  stacked [IDFT_re | IDFT_im]

    # ---- GFNet blocks (DEPTH is small & static -> unrolled) ----
    for d in range(depth):
        xn = layernorm(x, ln1_w_ref[d], ln1_b_ref[d])

        # GlobalFilter: rfft2 * W -> irfft2, factored as two stacked real-DFT
        # matmuls (MXU) plus a per-(freq, channel) complex-diagonal multiply (VPU).
        s = jnp.dot(dft, xn, preferred_element_type=jnp.float32)   # (2*FPAD, D)
        sr = s[:fpad]                                              # aligned slice
        si = s[fpad:]
        wr = wre_ref[d]                                            # (FPAD, D)
        wi = wim_ref[d]
        zr = sr * wr - si * wi
        zi = sr * wi + si * wr
        z = jnp.concatenate([zr, zi], axis=0)                      # (2*FPAD, D)
        xf = jnp.dot(idft, z, preferred_element_type=jnp.float32)  # (N, D)

        # norm2 + MLP (fc1 -> GELU -> fc2), residual add
        xn2 = layernorm(xf, ln2_w_ref[d], ln2_b_ref[d])
        h = jnp.dot(xn2, fc1_w_ref[d],
                    preferred_element_type=jnp.float32) + fc1_b_ref[d][None, :]
        h = gelu(h)                                                # (N, HID) lane-dense
        y = jnp.dot(h, fc2_w_ref[d],
                    preferred_element_type=jnp.float32) + fc2_b_ref[d][None, :]
        x = x + y

    # ---- final norm, mean over tokens, classifier head (lane-dense 128 wide) ----
    xn = layernorm(x, lnf_w_ref[0], lnf_b_ref[0])
    pooled = jnp.mean(xn, axis=0, keepdims=True)                   # (1, D)
    logits = jnp.dot(pooled, head_w_ref[...],
                     preferred_element_type=jnp.float32) + head_b_ref[...]
    out_ref[0] = logits                                            # (1, HEAD_PAD)


# ----------------------------- wrapper / glue ---------------------------------
def extract_patches(x_nchw, p):
    """(B, C, H, W) -> (B, N, C*p*p), patch order row-major over (grid_h, grid_w)."""
    b, c, h, w = x_nchw.shape
    gh, gw = h // p, w // p
    xp = x_nchw.reshape(b, c, gh, p, gw, p)
    return xp.transpose(0, 2, 4, 1, 3, 5).reshape(b, gh * gw, c * p * p)


def make_dft_matrices(a):
    """Real matrices s.t. per channel:  y = IDFT_re @ zr + IDFT_im @ zi  with
       (zr + i zi) = ((DFT_re @ x) + i (DFT_im @ x)) * W  reproduces
       rfft2 -> (*W) -> irfft2 (norm='ortho') on an (a, a) grid, tokens row-major."""
    n = a * a
    fh, fw = a, a // 2 + 1
    f = fh * fw
    eye = jnp.eye(n, dtype=jnp.float32).reshape(n, a, a)
    fwd = jnp.fft.rfft2(eye, axes=(1, 2), norm="ortho").reshape(n, f)      # (n, f) complex
    dft_re = jnp.real(fwd).T.astype(jnp.float32)                           # (f, n)
    dft_im = jnp.imag(fwd).T.astype(jnp.float32)                           # (f, n)
    eyef = jnp.eye(f, dtype=jnp.complex64).reshape(f, fh, fw)
    idft_re = jnp.fft.irfft2(eyef, s=(a, a), axes=(1, 2),
                             norm="ortho").reshape(f, n).T.astype(jnp.float32)   # (n, f)
    idft_im = jnp.fft.irfft2(1j * eyef, s=(a, a), axes=(1, 2),
                             norm="ortho").reshape(f, n).T.astype(jnp.float32)   # (n, f)
    return dft_re, dft_im, idft_re, idft_im


def make_stacked_dft(a, fpad):
    """Stack re/im DFT operators with sublane-aligned zero padding of the freq dim."""
    dft_re, dft_im, idft_re, idft_im = make_dft_matrices(a)
    f, n = dft_re.shape
    dft = jnp.zeros((2 * fpad, n), jnp.float32)
    dft = dft.at[:f].set(dft_re).at[fpad:fpad + f].set(dft_im)             # (2*fpad, n)
    idft = jnp.zeros((n, 2 * fpad), jnp.float32)
    idft = idft.at[:, :f].set(idft_re).at[:, fpad:fpad + f].set(idft_im)   # (n, 2*fpad)
    return dft, idft


def _const_spec(shape):
    nd = len(shape)
    return pl.BlockSpec(shape, lambda b, nd=nd: (0,) * nd)


@jax.jit
def gfnet_forward(x_img, params):
    (conv_w, conv_b, pos, dft, idft,
     ln1_w, ln1_b, wre, wim, ln2_w, ln2_b,
     fc1_w, fc1_b, fc2_w, fc2_b, lnf_w, lnf_b, head_w, head_b) = params

    xp = extract_patches(x_img, PATCH)                      # (B, N, Cpp)
    pe_w = conv_w.reshape(DIM, CPP).T                       # (Cpp, D)
    pos2 = pos.reshape(NTOK, DIM) + conv_b.reshape(1, DIM)  # fold conv bias into pos
    # zero-pad classifier to a lane-dense 128-wide output store
    head_w_pad = jnp.zeros((DIM, HEAD_PAD), jnp.float32).at[:, :NUM_CLASSES].set(head_w)
    head_b_pad = jnp.zeros((1, HEAD_PAD), jnp.float32).at[:, :NUM_CLASSES].set(head_b)

    args = (xp, pe_w, pos2, dft, idft,
            ln1_w, ln1_b, wre, wim, ln2_w, ln2_b,
            fc1_w, fc1_b, fc2_w, fc2_b, lnf_w, lnf_b, head_w_pad, head_b_pad)

    in_specs = [pl.BlockSpec((1, NTOK, CPP), lambda b: (b, 0, 0))]   # per-image patches
    in_specs += [_const_spec(a.shape) for a in args[1:]]             # resident weights

    out = pl.pallas_call(
        gfnet_kernel,
        out_shape=jax.ShapeDtypeStruct((BATCH, 1, HEAD_PAD), jnp.float32),
        grid=(BATCH,),
        in_specs=in_specs,
        out_specs=pl.BlockSpec((1, 1, HEAD_PAD), lambda b: (b, 0, 0)),
        compiler_params=pltpu.CompilerParams(dimension_semantics=("parallel",)),
    )(*args)
    return out[:, 0, :NUM_CLASSES]


# ----------------------------- plain-JAX reference ----------------------------
def _ln_ref(x, w, b):
    mu = jnp.mean(x, axis=-1, keepdims=True)
    var = jnp.mean((x - mu) ** 2, axis=-1, keepdims=True)
    return (x - mu) / jnp.sqrt(var + LN_EPS) * w + b


def _gelu_ref(x):
    return 0.5 * x * (1.0 + jax.lax.erf(x * INV_SQRT2))


def gfnet_reference(x_img, params, cw_all):
    (conv_w, conv_b, pos, _dft, _idft,
     ln1_w, ln1_b, _wr, _wi, ln2_w, ln2_b,
     fc1_w, fc1_b, fc2_w, fc2_b, lnf_w, lnf_b, head_w, head_b) = params
    hp = jax.lax.Precision.HIGHEST
    xp = extract_patches(x_img, PATCH)                                # (B, N, Cpp)
    pe_w = conv_w.reshape(DIM, CPP).T
    x = jnp.dot(xp, pe_w, precision=hp) + conv_b[None, None, :]
    x = x + pos
    for d in range(DEPTH):
        xn = _ln_ref(x, ln1_w[d], ln1_b[d])
        xv = xn.reshape(BATCH, GH, GH, DIM)
        xf = jnp.fft.rfft2(xv, axes=(1, 2), norm="ortho")
        wc = cw_all[d, ..., 0] + 1j * cw_all[d, ..., 1]
        xf = xf * wc[None]
        xs = jnp.fft.irfft2(xf, s=(GH, GH), axes=(1, 2), norm="ortho").reshape(BATCH, NTOK, DIM)
        xn2 = _ln_ref(xs, ln2_w[d], ln2_b[d])
        h = _gelu_ref(jnp.dot(xn2, fc1_w[d], precision=hp) + fc1_b[d])
        y = jnp.dot(h, fc2_w[d], precision=hp) + fc2_b[d]
        x = x + y
    xn = _ln_ref(x, lnf_w, lnf_b)
    pooled = jnp.mean(xn, axis=1)
    return jnp.dot(pooled, head_w, precision=hp) + head_b[0]


# ----------------------------- main -------------------------------------------
if __name__ == "__main__":
    key = jax.random.PRNGKey(0)
    ks = jax.random.split(key, 12)

    x_img = jax.random.normal(ks[0], (BATCH, CIN, IMG, IMG), dtype=jnp.float32)

    conv_w = 0.02 * jax.random.normal(ks[1], (DIM, CIN, PATCH, PATCH), dtype=jnp.float32)
    conv_b = 0.02 * jax.random.normal(ks[2], (DIM,), dtype=jnp.float32)
    pos = 0.02 * jax.random.normal(ks[3], (1, NTOK, DIM), dtype=jnp.float32)

    # per-block params (LayerNorm init: weight=1, bias=0 as in _init_weights)
    ln1_w = jnp.ones((DEPTH, DIM), jnp.float32); ln1_b = jnp.zeros((DEPTH, DIM), jnp.float32)
    ln2_w = jnp.ones((DEPTH, DIM), jnp.float32); ln2_b = jnp.zeros((DEPTH, DIM), jnp.float32)
    cw_all = 0.02 * jax.random.normal(ks[4], (DEPTH, FH, FW, DIM, 2), dtype=jnp.float32)
    wre_flat = cw_all[..., 0].reshape(DEPTH, NFREQ, DIM)
    wim_flat = cw_all[..., 1].reshape(DEPTH, NFREQ, DIM)
    wre = jnp.zeros((DEPTH, FPAD, DIM), jnp.float32).at[:, :NFREQ].set(wre_flat)
    wim = jnp.zeros((DEPTH, FPAD, DIM), jnp.float32).at[:, :NFREQ].set(wim_flat)
    fc1_w = 0.02 * jax.random.normal(ks[5], (DEPTH, DIM, HID), dtype=jnp.float32)
    fc1_b = 0.02 * jax.random.normal(ks[6], (DEPTH, HID), dtype=jnp.float32)
    fc2_w = 0.02 * jax.random.normal(ks[7], (DEPTH, HID, DIM), dtype=jnp.float32)
    fc2_b = 0.02 * jax.random.normal(ks[8], (DEPTH, DIM), dtype=jnp.float32)

    lnf_w = jnp.ones((1, DIM), jnp.float32); lnf_b = jnp.zeros((1, DIM), jnp.float32)
    head_w = 0.02 * jax.random.normal(ks[9], (DIM, NUM_CLASSES), dtype=jnp.float32)
    head_b = jnp.zeros((1, NUM_CLASSES), jnp.float32)

    # channel-independent stacked real DFT / inverse-DFT operators (shared across layers)
    dft, idft = make_stacked_dft(GH, FPAD)

    params = (conv_w, conv_b, pos, dft, idft,
              ln1_w, ln1_b, wre, wim, ln2_w, ln2_b,
              fc1_w, fc1_b, fc2_w, fc2_b, lnf_w, lnf_b, head_w, head_b)

    out = gfnet_forward(x_img, params)
    out = jax.block_until_ready(out)

    ref = jax.block_until_ready(gfnet_reference(x_img, params, cw_all))
    np.testing.assert_allclose(np.asarray(out), np.asarray(ref), atol=5e-3, rtol=5e-3)

    # TODO(synk): Dropout / DropPath are identity in eval mode and are omitted.
    print("KERNEL_OK")
</pallas_src>

<mosaic_0001>
module attributes {stable_mosaic.version = 11 : i64} {
  func.func @gfnet_kernel(%arg0: i32, %arg1: memref<1x16x48xf32, #tpu.memory_space<vmem>>, %arg2: memref<48x32xf32, #tpu.memory_space<vmem>>, %arg3: memref<16x32xf32, #tpu.memory_space<vmem>>, %arg4: memref<32x16xf32, #tpu.memory_space<vmem>>, %arg5: memref<16x32xf32, #tpu.memory_space<vmem>>, %arg6: memref<2x32xf32, #tpu.memory_space<vmem>>, %arg7: memref<2x32xf32, #tpu.memory_space<vmem>>, %arg8: memref<2x16x32xf32, #tpu.memory_space<vmem>>, %arg9: memref<2x16x32xf32, #tpu.memory_space<vmem>>, %arg10: memref<2x32xf32, #tpu.memory_space<vmem>>, %arg11: memref<2x32xf32, #tpu.memory_space<vmem>>, %arg12: memref<2x32x128xf32, #tpu.memory_space<vmem>>, %arg13: memref<2x128xf32, #tpu.memory_space<vmem>>, %arg14: memref<2x128x32xf32, #tpu.memory_space<vmem>>, %arg15: memref<2x32xf32, #tpu.memory_space<vmem>>, %arg16: memref<1x32xf32, #tpu.memory_space<vmem>>, %arg17: memref<1x32xf32, #tpu.memory_space<vmem>>, %arg18: memref<32x128xf32, #tpu.memory_space<vmem>>, %arg19: memref<1x128xf32, #tpu.memory_space<vmem>>, %arg20: memref<1x1x128xf32, #tpu.memory_space<vmem>>) attributes {dimension_semantics = [#tpu.dimension_semantics<parallel>], iteration_bounds = array<i64: 2>, scalar_prefetch = 0 : i64, scratch_operands = 0 : i64, tpu.core_type = #tpu.core_type<tc>, window_params = [{transform_indices = @transform_0, window_bounds = array<i64: 1, 16, 48>}, {pipeline_mode = #tpu.pipeline_mode<synchronous>, transform_indices = @transform_1, window_bounds = array<i64: 48, 32>}, {pipeline_mode = #tpu.pipeline_mode<synchronous>, transform_indices = @transform_2, window_bounds = array<i64: 16, 32>}, {pipeline_mode = #tpu.pipeline_mode<synchronous>, transform_indices = @transform_3, window_bounds = array<i64: 32, 16>}, {pipeline_mode = #tpu.pipeline_mode<synchronous>, transform_indices = @transform_4, window_bounds = array<i64: 16, 32>}, {pipeline_mode = #tpu.pipeline_mode<synchronous>, transform_indices = @transform_5, window_bounds = array<i64: 2, 32>}, {pipeline_mode = #tpu.pipeline_mode<synchronous>, transform_indices = @transform_6, window_bounds = array<i64: 2, 32>}, {pipeline_mode = #tpu.pipeline_mode<synchronous>, transform_indices = @transform_7, window_bounds = array<i64: 2, 16, 32>}, {pipeline_mode = #tpu.pipeline_mode<synchronous>, transform_indices = @transform_8, window_bounds = array<i64: 2, 16, 32>}, {pipeline_mode = #tpu.pipeline_mode<synchronous>, transform_indices = @transform_9, window_bounds = array<i64: 2, 32>}, {pipeline_mode = #tpu.pipeline_mode<synchronous>, transform_indices = @transform_10, window_bounds = array<i64: 2, 32>}, {pipeline_mode = #tpu.pipeline_mode<synchronous>, transform_indices = @transform_11, window_bounds = array<i64: 2, 32, 128>}, {pipeline_mode = #tpu.pipeline_mode<synchronous>, transform_indices = @transform_12, window_bounds = array<i64: 2, 128>}, {pipeline_mode = #tpu.pipeline_mode<synchronous>, transform_indices = @transform_13, window_bounds = array<i64: 2, 128, 32>}, {pipeline_mode = #tpu.pipeline_mode<synchronous>, transform_indices = @transform_14, window_bounds = array<i64: 2, 32>}, {pipeline_mode = #tpu.pipeline_mode<synchronous>, transform_indices = @transform_15, window_bounds = array<i64: 1, 32>}, {pipeline_mode = #tpu.pipeline_mode<synchronous>, transform_indices = @transform_16, window_bounds = array<i64: 1, 32>}, {pipeline_mode = #tpu.pipeline_mode<synchronous>, transform_indices = @transform_17, window_bounds = array<i64: 32, 128>}, {pipeline_mode = #tpu.pipeline_mode<synchronous>, transform_indices = @transform_18, window_bounds = array<i64: 1, 128>}, {transform_indices = @transform_19, window_bounds = array<i64: 1, 1, 128>}]} {
    %c0 = arith.constant 0 : index
    %c0_0 = arith.constant 0 : index
    %c0_1 = arith.constant 0 : index
    %0 = vector.load %arg1[%c0, %c0_0, %c0_1] : memref<1x16x48xf32, #tpu.memory_space<vmem>>, vector<1x16x48xf32>
    %1 = vector.shape_cast %0 : vector<1x16x48xf32> to vector<16x48xf32>
    %c0_2 = arith.constant 0 : index
    %c0_3 = arith.constant 0 : index
    %2 = vector.load %arg2[%c0_2, %c0_3] : memref<48x32xf32, #tpu.memory_space<vmem>>, vector<48x32xf32>
    %cst = arith.constant dense<0.000000e+00> : vector<16x32xf32>
    %3 = tpu.matmul %1, %2, %cst {dimension_numbers = #tpu.dot_dimension_numbers<[1], [0], [0], [1], [0, 0, 1, 1], [], []>} : vector<16x48xf32>, vector<48x32xf32>, vector<16x32xf32> -> vector<16x32xf32>
    %c0_4 = arith.constant 0 : index
    %c0_5 = arith.constant 0 : index
    %4 = vector.load %arg3[%c0_4, %c0_5] : memref<16x32xf32, #tpu.memory_space<vmem>>, vector<16x32xf32>
    %5 = arith.addf %3, %4 : vector<16x32xf32>
    %c0_6 = arith.constant 0 : index
    %c0_7 = arith.constant 0 : index
    %6 = vector.load %arg4[%c0_6, %c0_7] : memref<32x16xf32, #tpu.memory_space<vmem>>, vector<32x16xf32>
    %c0_8 = arith.constant 0 : index
    %c0_9 = arith.constant 0 : index
    %7 = vector.load %arg5[%c0_8, %c0_9] : memref<16x32xf32, #tpu.memory_space<vmem>>, vector<16x32xf32>
    %c0_10 = arith.constant 0 : index
    %c0_11 = arith.constant 0 : index
    %8 = vector.load %arg6[%c0_10, %c0_11] : memref<2x32xf32, #tpu.memory_space<vmem>>, vector<1x32xf32>
    %9 = vector.shape_cast %8 : vector<1x32xf32> to vector<32xf32>
    %c0_12 = arith.constant 0 : index
    %c0_13 = arith.constant 0 : index
    %10 = vector.load %arg7[%c0_12, %c0_13] : memref<2x32xf32, #tpu.memory_space<vmem>>, vector<1x32xf32>
    %11 = vector.shape_cast %10 : vector<1x32xf32> to vector<32xf32>
    %cst_14 = arith.constant dense<0.000000e+00> : vector<16xf32>
    %12 = vector.multi_reduction <add>, %5, %cst_14 [1] : vector<16x32xf32> to vector<16xf32>
    %13 = vector.shape_cast %12 : vector<16xf32> to vector<16x1xf32>
    %cst_15 = arith.constant 3.200000e+01 : f32
    %14 = vector.broadcast %cst_15 : f32 to vector<16x1xf32>
    %15 = arith.divf %13, %14 : vector<16x1xf32>
    %16 = vector.broadcast %15 : vector<16x1xf32> to vector<16x32xf32>
    %17 = arith.subf %5, %16 : vector<16x32xf32>
    %18 = arith.mulf %17, %17 : vector<16x32xf32>
    %cst_16 = arith.constant dense<0.000000e+00> : vector<16xf32>
    %19 = vector.multi_reduction <add>, %18, %cst_16 [1] : vector<16x32xf32> to vector<16xf32>
    %20 = vector.shape_cast %19 : vector<16xf32> to vector<16x1xf32>
    %cst_17 = arith.constant 3.200000e+01 : f32
    %21 = vector.broadcast %cst_17 : f32 to vector<16x1xf32>
    %22 = arith.divf %20, %21 : vector<16x1xf32>
    %23 = vector.broadcast %15 : vector<16x1xf32> to vector<16x32xf32>
    %24 = arith.subf %5, %23 : vector<16x32xf32>
    %cst_18 = arith.constant 9.99999997E-7 : f32
    %25 = vector.broadcast %cst_18 : f32 to vector<16x1xf32>
    %26 = arith.addf %22, %25 : vector<16x1xf32>
    %27 = math.rsqrt %26 : vector<16x1xf32>
    %28 = vector.broadcast %27 : vector<16x1xf32> to vector<16x32xf32>
    %29 = arith.mulf %24, %28 : vector<16x32xf32>
    %30 = vector.shape_cast %9 : vector<32xf32> to vector<1x32xf32>
    %31 = vector.broadcast %30 : vector<1x32xf32> to vector<16x32xf32>
    %32 = arith.mulf %29, %31 : vector<16x32xf32>
    %33 = vector.shape_cast %11 : vector<32xf32> to vector<1x32xf32>
    %34 = vector.broadcast %33 : vector<1x32xf32> to vector<16x32xf32>
    %35 = arith.addf %32, %34 : vector<16x32xf32>
    %cst_19 = arith.constant dense<0.000000e+00> : vector<32x32xf32>
    %36 = tpu.matmul %6, %35, %cst_19 {dimension_numbers = #tpu.dot_dimension_numbers<[1], [0], [0], [1], [0, 0, 1, 1], [], []>} : vector<32x16xf32>, vector<16x32xf32>, vector<32x32xf32> -> vector<32x32xf32>
    %37 = vector.extract_strided_slice %36 {offsets = [0, 0], sizes = [16, 32], strides = [1, 1]} : vector<32x32xf32> to vector<16x32xf32>
    %38 = vector.extract_strided_slice %36 {offsets = [16, 0], sizes = [16, 32], strides = [1, 1]} : vector<32x32xf32> to vector<16x32xf32>
    %c0_20 = arith.constant 0 : index
    %c0_21 = arith.constant 0 : index
    %c0_22 = arith.constant 0 : index
    %39 = vector.load %arg8[%c0_20, %c0_21, %c0_22] : memref<2x16x32xf32, #tpu.memory_space<vmem>>, vector<1x16x32xf32>
    %40 = vector.shape_cast %39 : vector<1x16x32xf32> to vector<16x32xf32>
    %c0_23 = arith.constant 0 : index
    %c0_24 = arith.constant 0 : index
    %c0_25 = arith.constant 0 : index
    %41 = vector.load %arg9[%c0_23, %c0_24, %c0_25] : memref<2x16x32xf32, #tpu.memory_space<vmem>>, vector<1x16x32xf32>
    %42 = vector.shape_cast %41 : vector<1x16x32xf32> to vector<16x32xf32>
    %43 = arith.mulf %37, %40 : vector<16x32xf32>
    %44 = arith.mulf %38, %42 : vector<16x32xf32>
    %45 = arith.subf %43, %44 : vector<16x32xf32>
    %46 = arith.mulf %37, %42 : vector<16x32xf32>
    %47 = arith.mulf %38, %40 : vector<16x32xf32>
    %48 = arith.addf %46, %47 : vector<16x32xf32>
    %49 = tpu.concatenate %45, %48 in 0 : vector<16x32xf32>, vector<16x32xf32> -> vector<32x32xf32>
    %cst_26 = arith.constant dense<0.000000e+00> : vector<16x32xf32>
    %50 = tpu.matmul %7, %49, %cst_26 {dimension_numbers = #tpu.dot_dimension_numbers<[1], [0], [0], [1], [0, 0, 1, 1], [], []>} : vector<16x32xf32>, vector<32x32xf32>, vector<16x32xf32> -> vector<16x32xf32>
    %c0_27 = arith.constant 0 : index
    %c0_28 = arith.constant 0 : index
    %51 = vector.load %arg10[%c0_27, %c0_28] : memref<2x32xf32, #tpu.memory_space<vmem>>, vector<1x32xf32>
    %52 = vector.shape_cast %51 : vector<1x32xf32> to vector<32xf32>
    %c0_29 = arith.constant 0 : index
    %c0_30 = arith.constant 0 : index
    %53 = vector.load %arg11[%c0_29, %c0_30] : memref<2x32xf32, #tpu.memory_space<vmem>>, vector<1x32xf32>
    %54 = vector.shape_cast %53 : vector<1x32xf32> to vector<32xf32>
    %cst_31 = arith.constant dense<0.000000e+00> : vector<16xf32>
    %55 = vector.multi_reduction <add>, %50, %cst_31 [1] : vector<16x32xf32> to vector<16xf32>
    %56 = vector.shape_cast %55 : vector<16xf32> to vector<16x1xf32>
    %cst_32 = arith.constant 3.200000e+01 : f32
    %57 = vector.broadcast %cst_32 : f32 to vector<16x1xf32>
    %58 = arith.divf %56, %57 : vector<16x1xf32>
    %59 = vector.broadcast %58 : vector<16x1xf32> to vector<16x32xf32>
    %60 = arith.subf %50, %59 : vector<16x32xf32>
    %61 = arith.mulf %60, %60 : vector<16x32xf32>
    %cst_33 = arith.constant dense<0.000000e+00> : vector<16xf32>
    %62 = vector.multi_reduction <add>, %61, %cst_33 [1] : vector<16x32xf32> to vector<16xf32>
    %63 = vector.shape_cast %62 : vector<16xf32> to vector<16x1xf32>
    %cst_34 = arith.constant 3.200000e+01 : f32
    %64 = vector.broadcast %cst_34 : f32 to vector<16x1xf32>
    %65 = arith.divf %63, %64 : vector<16x1xf32>
    %66 = vector.broadcast %58 : vector<16x1xf32> to vector<16x32xf32>
    %67 = arith.subf %50, %66 : vector<16x32xf32>
    %cst_35 = arith.constant 9.99999997E-7 : f32
    %68 = vector.broadcast %cst_35 : f32 to vector<16x1xf32>
    %69 = arith.addf %65, %68 : vector<16x1xf32>
    %70 = math.rsqrt %69 : vector<16x1xf32>
    %71 = vector.broadcast %70 : vector<16x1xf32> to vector<16x32xf32>
    %72 = arith.mulf %67, %71 : vector<16x32xf32>
    %73 = vector.shape_cast %52 : vector<32xf32> to vector<1x32xf32>
    %74 = vector.broadcast %73 : vector<1x32xf32> to vector<16x32xf32>
    %75 = arith.mulf %72, %74 : vector<16x32xf32>
    %76 = vector.shape_cast %54 : vector<32xf32> to vector<1x32xf32>
    %77 = vector.broadcast %76 : vector<1x32xf32> to vector<16x32xf32>
    %78 = arith.addf %75, %77 : vector<16x32xf32>
    %c0_36 = arith.constant 0 : index
    %c0_37 = arith.constant 0 : index
    %c0_38 = arith.constant 0 : index
    %79 = vector.load %arg12[%c0_36, %c0_37, %c0_38] : memref<2x32x128xf32, #tpu.memory_space<vmem>>, vector<1x32x128xf32>
    %80 = vector.shape_cast %79 : vector<1x32x128xf32> to vector<32x128xf32>
    %cst_39 = arith.constant dense<0.000000e+00> : vector<16x128xf32>
    %81 = tpu.matmul %78, %80, %cst_39 {dimension_numbers = #tpu.dot_dimension_numbers<[1], [0], [0], [1], [0, 0, 1, 1], [], []>} : vector<16x32xf32>, vector<32x128xf32>, vector<16x128xf32> -> vector<16x128xf32>
    %c0_40 = arith.constant 0 : index
    %c0_41 = arith.constant 0 : index
    %82 = vector.load %arg13[%c0_40, %c0_41] : memref<2x128xf32, #tpu.memory_space<vmem>>, vector<1x128xf32>
    %83 = vector.shape_cast %82 : vector<1x128xf32> to vector<128xf32>
    %84 = vector.shape_cast %83 : vector<128xf32> to vector<1x128xf32>
    %85 = vector.broadcast %84 : vector<1x128xf32> to vector<16x128xf32>
    %86 = arith.addf %81, %85 : vector<16x128xf32>
    %cst_42 = arith.constant 5.000000e-01 : f32
    %87 = vector.broadcast %cst_42 : f32 to vector<16x128xf32>
    %88 = arith.mulf %87, %86 : vector<16x128xf32>
    %cst_43 = arith.constant 0.707106769 : f32
    %89 = vector.broadcast %cst_43 : f32 to vector<16x128xf32>
    %90 = arith.mulf %86, %89 : vector<16x128xf32>
    %91 = math.erf %90 : vector<16x128xf32>
    %cst_44 = arith.constant 1.000000e+00 : f32
    %92 = vector.broadcast %cst_44 : f32 to vector<16x128xf32>
    %93 = arith.addf %92, %91 : vector<16x128xf32>
    %94 = arith.mulf %88, %93 : vector<16x128xf32>
    %c0_45 = arith.constant 0 : index
    %c0_46 = arith.constant 0 : index
    %c0_47 = arith.constant 0 : index
    %95 = vector.load %arg14[%c0_45, %c0_46, %c0_47] : memref<2x128x32xf32, #tpu.memory_space<vmem>>, vector<1x128x32xf32>
    %96 = vector.shape_cast %95 : vector<1x128x32xf32> to vector<128x32xf32>
    %cst_48 = arith.constant dense<0.000000e+00> : vector<16x32xf32>
    %97 = tpu.matmul %94, %96, %cst_48 {dimension_numbers = #tpu.dot_dimension_numbers<[1], [0], [0], [1], [0, 0, 1, 1], [], []>} : vector<16x128xf32>, vector<128x32xf32>, vector<16x32xf32> -> vector<16x32xf32>
    %c0_49 = arith.constant 0 : index
    %c0_50 = arith.constant 0 : index
    %98 = vector.load %arg15[%c0_49, %c0_50] : memref<2x32xf32, #tpu.memory_space<vmem>>, vector<1x32xf32>
    %99 = vector.shape_cast %98 : vector<1x32xf32> to vector<32xf32>
    %100 = vector.shape_cast %99 : vector<32xf32> to vector<1x32xf32>
    %101 = vector.broadcast %100 : vector<1x32xf32> to vector<16x32xf32>
    %102 = arith.addf %97, %101 : vector<16x32xf32>
    %103 = arith.addf %5, %102 : vector<16x32xf32>
    %c1 = arith.constant 1 : index
    %c0_51 = arith.constant 0 : index
    %104 = vector.load %arg6[%c1, %c0_51] : memref<2x32xf32, #tpu.memory_space<vmem>>, vector<1x32xf32>
    %105 = vector.shape_cast %104 : vector<1x32xf32> to vector<32xf32>
    %c1_52 = arith.constant 1 : index
    %c0_53 = arith.constant 0 : index
    %106 = vector.load %arg7[%c1_52, %c0_53] : memref<2x32xf32, #tpu.memory_space<vmem>>, vector<1x32xf32>
    %107 = vector.shape_cast %106 : vector<1x32xf32> to vector<32xf32>
    %cst_54 = arith.constant dense<0.000000e+00> : vector<16xf32>
    %108 = vector.multi_reduction <add>, %103, %cst_54 [1] : vector<16x32xf32> to vector<16xf32>
    %109 = vector.shape_cast %108 : vector<16xf32> to vector<16x1xf32>
    %cst_55 = arith.constant 3.200000e+01 : f32
    %110 = vector.broadcast %cst_55 : f32 to vector<16x1xf32>
    %111 = arith.divf %109, %110 : vector<16x1xf32>
    %112 = vector.broadcast %111 : vector<16x1xf32> to vector<16x32xf32>
    %113 = arith.subf %103, %112 : vector<16x32xf32>
    %114 = arith.mulf %113, %113 : vector<16x32xf32>
    %cst_56 = arith.constant dense<0.000000e+00> : vector<16xf32>
    %115 = vector.multi_reduction <add>, %114, %cst_56 [1] : vector<16x32xf32> to vector<16xf32>
    %116 = vector.shape_cast %115 : vector<16xf32> to vector<16x1xf32>
    %cst_57 = arith.constant 3.200000e+01 : f32
    %117 = vector.broadcast %cst_57 : f32 to vector<16x1xf32>
    %118 = arith.divf %116, %117 : vector<16x1xf32>
    %119 = vector.broadcast %111 : vector<16x1xf32> to vector<16x32xf32>
    %120 = arith.subf %103, %119 : vector<16x32xf32>
    %cst_58 = arith.constant 9.99999997E-7 : f32
    %121 = vector.broadcast %cst_58 : f32 to vector<16x1xf32>
    %122 = arith.addf %118, %121 : vector<16x1xf32>
    %123 = math.rsqrt %122 : vector<16x1xf32>
    %124 = vector.broadcast %123 : vector<16x1xf32> to vector<16x32xf32>
    %125 = arith.mulf %120, %124 : vector<16x32xf32>
    %126 = vector.shape_cast %105 : vector<32xf32> to vector<1x32xf32>
    %127 = vector.broadcast %126 : vector<1x32xf32> to vector<16x32xf32>
    %128 = arith.mulf %125, %127 : vector<16x32xf32>
    %129 = vector.shape_cast %107 : vector<32xf32> to vector<1x32xf32>
    %130 = vector.broadcast %129 : vector<1x32xf32> to vector<16x32xf32>
    %131 = arith.addf %128, %130 : vector<16x32xf32>
    %cst_59 = arith.constant dense<0.000000e+00> : vector<32x32xf32>
    %132 = tpu.matmul %6, %131, %cst_59 {dimension_numbers = #tpu.dot_dimension_numbers<[1], [0], [0], [1], [0, 0, 1, 1], [], []>} : vector<32x16xf32>, vector<16x32xf32>, vector<32x32xf32> -> vector<32x32xf32>
    %133 = vector.extract_strided_slice %132 {offsets = [0, 0], sizes = [16, 32], strides = [1, 1]} : vector<32x32xf32> to vector<16x32xf32>
    %134 = vector.extract_strided_slice %132 {offsets = [16, 0], sizes = [16, 32], strides = [1, 1]} : vector<32x32xf32> to vector<16x32xf32>
    %c1_60 = arith.constant 1 : index
    %c0_61 = arith.constant 0 : index
    %c0_62 = arith.constant 0 : index
    %135 = vector.load %arg8[%c1_60, %c0_61, %c0_62] : memref<2x16x32xf32, #tpu.memory_space<vmem>>, vector<1x16x32xf32>
    %136 = vector.shape_cast %135 : vector<1x16x32xf32> to vector<16x32xf32>
    %c1_63 = arith.constant 1 : index
    %c0_64 = arith.constant 0 : index
    %c0_65 = arith.constant 0 : index
    %137 = vector.load %arg9[%c1_63, %c0_64, %c0_65] : memref<2x16x32xf32, #tpu.memory_space<vmem>>, vector<1x16x32xf32>
    %138 = vector.shape_cast %137 : vector<1x16x32xf32> to vector<16x32xf32>
    %139 = arith.mulf %133, %136 : vector<16x32xf32>
    %140 = arith.mulf %134, %138 : vector<16x32xf32>
    %141 = arith.subf %139, %140 : vector<16x32xf32>
    %142 = arith.mulf %133, %138 : vector<16x32xf32>
    %143 = arith.mulf %134, %136 : vector<16x32xf32>
    %144 = arith.addf %142, %143 : vector<16x32xf32>
    %145 = tpu.concatenate %141, %144 in 0 : vector<16x32xf32>, vector<16x32xf32> -> vector<32x32xf32>
    %cst_66 = arith.constant dense<0.000000e+00> : vector<16x32xf32>
    %146 = tpu.matmul %7, %145, %cst_66 {dimension_numbers = #tpu.dot_dimension_numbers<[1], [0], [0], [1], [0, 0, 1, 1], [], []>} : vector<16x32xf32>, vector<32x32xf32>, vector<16x32xf32> -> vector<16x32xf32>
    %c1_67 = arith.constant 1 : index
    %c0_68 = arith.constant 0 : index
    %147 = vector.load %arg10[%c1_67, %c0_68] : memref<2x32xf32, #tpu.memory_space<vmem>>, vector<1x32xf32>
    %148 = vector.shape_cast %147 : vector<1x32xf32> to vector<32xf32>
    %c1_69 = arith.constant 1 : index
    %c0_70 = arith.constant 0 : index
    %149 = vector.load %arg11[%c1_69, %c0_70] : memref<2x32xf32, #tpu.memory_space<vmem>>, vector<1x32xf32>
    %150 = vector.shape_cast %149 : vector<1x32xf32> to vector<32xf32>
    %cst_71 = arith.constant dense<0.000000e+00> : vector<16xf32>
    %151 = vector.multi_reduction <add>, %146, %cst_71 [1] : vector<16x32xf32> to vector<16xf32>
    %152 = vector.shape_cast %151 : vector<16xf32> to vector<16x1xf32>
    %cst_72 = arith.constant 3.200000e+01 : f32
    %153 = vector.broadcast %cst_72 : f32 to vector<16x1xf32>
    %154 = arith.divf %152, %153 : vector<16x1xf32>
    %155 = vector.broadcast %154 : vector<16x1xf32> to vector<16x32xf32>
    %156 = arith.subf %146, %155 : vector<16x32xf32>
    %157 = arith.mulf %156, %156 : vector<16x32xf32>
    %cst_73 = arith.constant dense<0.000000e+00> : vector<16xf32>
    %158 = vector.multi_reduction <add>, %157, %cst_73 [1] : vector<16x32xf32> to vector<16xf32>
    %159 = vector.shape_cast %158 : vector<16xf32> to vector<16x1xf32>
    %cst_74 = arith.constant 3.200000e+01 : f32
    %160 = vector.broadcast %cst_74 : f32 to vector<16x1xf32>
    %161 = arith.divf %159, %160 : vector<16x1xf32>
    %162 = vector.broadcast %154 : vector<16x1xf32> to vector<16x32xf32>
    %163 = arith.subf %146, %162 : vector<16x32xf32>
    %cst_75 = arith.constant 9.99999997E-7 : f32
    %164 = vector.broadcast %cst_75 : f32 to vector<16x1xf32>
    %165 = arith.addf %161, %164 : vector<16x1xf32>
    %166 = math.rsqrt %165 : vector<16x1xf32>
    %167 = vector.broadcast %166 : vector<16x1xf32> to vector<16x32xf32>
    %168 = arith.mulf %163, %167 : vector<16x32xf32>
    %169 = vector.shape_cast %148 : vector<32xf32> to vector<1x32xf32>
    %170 = vector.broadcast %169 : vector<1x32xf32> to vector<16x32xf32>
    %171 = arith.mulf %168, %170 : vector<16x32xf32>
    %172 = vector.shape_cast %150 : vector<32xf32> to vector<1x32xf32>
    %173 = vector.broadcast %172 : vector<1x32xf32> to vector<16x32xf32>
    %174 = arith.addf %171, %173 : vector<16x32xf32>
    %c1_76 = arith.constant 1 : index
    %c0_77 = arith.constant 0 : index
    %c0_78 = arith.constant 0 : index
    %175 = vector.load %arg12[%c1_76, %c0_77, %c0_78] : memref<2x32x128xf32, #tpu.memory_space<vmem>>, vector<1x32x128xf32>
    %176 = vector.shape_cast %175 : vector<1x32x128xf32> to vector<32x128xf32>
    %cst_79 = arith.constant dense<0.000000e+00> : vector<16x128xf32>
    %177 = tpu.matmul %174, %176, %cst_79 {dimension_numbers = #tpu.dot_dimension_numbers<[1], [0], [0], [1], [0, 0, 1, 1], [], []>} : vector<16x32xf32>, vector<32x128xf32>, vector<16x128xf32> -> vector<16x128xf32>
    %c1_80 = arith.constant 1 : index
    %c0_81 = arith.constant 0 : index
    %178 = vector.load %arg13[%c1_80, %c0_81] : memref<2x128xf32, #tpu.memory_space<vmem>>, vector<1x128xf32>
    %179 = vector.shape_cast %178 : vector<1x128xf32> to vector<128xf32>
    %180 = vector.shape_cast %179 : vector<128xf32> to vector<1x128xf32>
    %181 = vector.broadcast %180 : vector<1x128xf32> to vector<16x128xf32>
    %182 = arith.addf %177, %181 : vector<16x128xf32>
    %cst_82 = arith.constant 5.000000e-01 : f32
    %183 = vector.broadcast %cst_82 : f32 to vector<16x128xf32>
    %184 = arith.mulf %183, %182 : vector<16x128xf32>
    %cst_83 = arith.constant 0.707106769 : f32
    %185 = vector.broadcast %cst_83 : f32 to vector<16x128xf32>
    %186 = arith.mulf %182, %185 : vector<16x128xf32>
    %187 = math.erf %186 : vector<16x128xf32>
    %cst_84 = arith.constant 1.000000e+00 : f32
    %188 = vector.broadcast %cst_84 : f32 to vector<16x128xf32>
    %189 = arith.addf %188, %187 : vector<16x128xf32>
    %190 = arith.mulf %184, %189 : vector<16x128xf32>
    %c1_85 = arith.constant 1 : index
    %c0_86 = arith.constant 0 : index
    %c0_87 = arith.constant 0 : index
    %191 = vector.load %arg14[%c1_85, %c0_86, %c0_87] : memref<2x128x32xf32, #tpu.memory_space<vmem>>, vector<1x128x32xf32>
    %192 = vector.shape_cast %191 : vector<1x128x32xf32> to vector<128x32xf32>
    %cst_88 = arith.constant dense<0.000000e+00> : vector<16x32xf32>
    %193 = tpu.matmul %190, %192, %cst_88 {dimension_numbers = #tpu.dot_dimension_numbers<[1], [0], [0], [1], [0, 0, 1, 1], [], []>} : vector<16x128xf32>, vector<128x32xf32>, vector<16x32xf32> -> vector<16x32xf32>
    %c1_89 = arith.constant 1 : index
    %c0_90 = arith.constant 0 : index
    %194 = vector.load %arg15[%c1_89, %c0_90] : memref<2x32xf32, #tpu.memory_space<vmem>>, vector<1x32xf32>
    %195 = vector.shape_cast %194 : vector<1x32xf32> to vector<32xf32>
    %196 = vector.shape_cast %195 : vector<32xf32> to vector<1x32xf32>
    %197 = vector.broadcast %196 : vector<1x32xf32> to vector<16x32xf32>
    %198 = arith.addf %193, %197 : vector<16x32xf32>
    %199 = arith.addf %103, %198 : vector<16x32xf32>
    %c0_91 = arith.constant 0 : index
    %c0_92 = arith.constant 0 : index
    %200 = vector.load %arg16[%c0_91, %c0_92] : memref<1x32xf32, #tpu.memory_space<vmem>>, vector<1x32xf32>
    %201 = vector.shape_cast %200 : vector<1x32xf32> to vector<32xf32>
    %c0_93 = arith.constant 0 : index
    %c0_94 = arith.constant 0 : index
    %202 = vector.load %arg17[%c0_93, %c0_94] : memref<1x32xf32, #tpu.memory_space<vmem>>, vector<1x32xf32>
    %203 = vector.shape_cast %202 : vector<1x32xf32> to vector<32xf32>
    %cst_95 = arith.constant dense<0.000000e+00> : vector<16xf32>
    %204 = vector.multi_reduction <add>, %199, %cst_95 [1] : vector<16x32xf32> to vector<16xf32>
    %205 = vector.shape_cast %204 : vector<16xf32> to vector<16x1xf32>
    %cst_96 = arith.constant 3.200000e+01 : f32
    %206 = vector.broadcast %cst_96 : f32 to vector<16x1xf32>
    %207 = arith.divf %205, %206 : vector<16x1xf32>
    %208 = vector.broadcast %207 : vector<16x1xf32> to vector<16x32xf32>
    %209 = arith.subf %199, %208 : vector<16x32xf32>
    %210 = arith.mulf %209, %209 : vector<16x32xf32>
    %cst_97 = arith.constant dense<0.000000e+00> : vector<16xf32>
    %211 = vector.multi_reduction <add>, %210, %cst_97 [1] : vector<16x32xf32> to vector<16xf32>
    %212 = vector.shape_cast %211 : vector<16xf32> to vector<16x1xf32>
    %cst_98 = arith.constant 3.200000e+01 : f32
    %213 = vector.broadcast %cst_98 : f32 to vector<16x1xf32>
    %214 = arith.divf %212, %213 : vector<16x1xf32>
    %215 = vector.broadcast %207 : vector<16x1xf32> to vector<16x32xf32>
    %216 = arith.subf %199, %215 : vector<16x32xf32>
    %cst_99 = arith.constant 9.99999997E-7 : f32
    %217 = vector.broadcast %cst_99 : f32 to vector<16x1xf32>
    %218 = arith.addf %214, %217 : vector<16x1xf32>
    %219 = math.rsqrt %218 : vector<16x1xf32>
    %220 = vector.broadcast %219 : vector<16x1xf32> to vector<16x32xf32>
    %221 = arith.mulf %216, %220 : vector<16x32xf32>
    %222 = vector.shape_cast %201 : vector<32xf32> to vector<1x32xf32>
    %223 = vector.broadcast %222 : vector<1x32xf32> to vector<16x32xf32>
    %224 = arith.mulf %221, %223 : vector<16x32xf32>
    %225 = vector.shape_cast %203 : vector<32xf32> to vector<1x32xf32>
    %226 = vector.broadcast %225 : vector<1x32xf32> to vector<16x32xf32>
    %227 = arith.addf %224, %226 : vector<16x32xf32>
    %cst_100 = arith.constant dense<0.000000e+00> : vector<32xf32>
    %228 = vector.multi_reduction <add>, %227, %cst_100 [0] : vector<16x32xf32> to vector<32xf32>
    %229 = vector.shape_cast %228 : vector<32xf32> to vector<1x32xf32>
    %cst_101 = arith.constant 1.600000e+01 : f32
    %230 = vector.broadcast %cst_101 : f32 to vector<1x32xf32>
    %231 = arith.divf %229, %230 : vector<1x32xf32>
    %c0_102 = arith.constant 0 : index
    %c0_103 = arith.constant 0 : index
    %232 = vector.load %arg18[%c0_102, %c0_103] : memref<32x128xf32, #tpu.memory_space<vmem>>, vector<32x128xf32>
    %cst_104 = arith.constant dense<0.000000e+00> : vector<1x128xf32>
    %233 = tpu.matmul %231, %232, %cst_104 {dimension_numbers = #tpu.dot_dimension_numbers<[1], [0], [0], [1], [0, 0, 1, 1], [], []>} : vector<1x32xf32>, vector<32x128xf32>, vector<1x128xf32> -> vector<1x128xf32>
    %c0_105 = arith.constant 0 : index
    %c0_106 = arith.constant 0 : index
    %234 = vector.load %arg19[%c0_105, %c0_106] : memref<1x128xf32, #tpu.memory_space<vmem>>, vector<1x128xf32>
    %235 = arith.addf %233, %234 : vector<1x128xf32>
    %c0_107 = arith.constant 0 : index
    %c0_108 = arith.constant 0 : index
    %c0_109 = arith.constant 0 : index
    %236 = vector.load %arg20[%c0_107, %c0_108, %c0_109] : memref<1x1x128xf32, #tpu.memory_space<vmem>>, vector<1x1x128xf32>
    %237 = vector.shape_cast %236 : vector<1x1x128xf32> to vector<1x128xf32>
    %238 = vector.shape_cast %235 : vector<1x128xf32> to vector<1x1x128xf32>
    tpu.vector_store %arg20[%c0_107, %c0_108, %c0_109], %238 {strides = array<i32>} : memref<1x1x128xf32, #tpu.memory_space<vmem>>, vector<1x1x128xf32>,
    return
  }
  func.func @transform_0(%arg0: i32) -> (i32, i32, i32) {
    %c0_i32 = arith.constant 0 : i32
    %c0_i32_0 = arith.constant 0 : i32
    %c0_i32_1 = arith.constant 0 : i32
    return %arg0, %c0_i32, %c0_i32_0 : i32, i32, i32
  }
  func.func @transform_1(%arg0: i32) -> (i32, i32) {
    %c0_i32 = arith.constant 0 : i32
    %c0_i32_0 = arith.constant 0 : i32
    %c0_i32_1 = arith.constant 0 : i32
    return %c0_i32, %c0_i32_0 : i32, i32
  }
  func.func @transform_2(%arg0: i32) -> (i32, i32) {
    %c0_i32 = arith.constant 0 : i32
    %c0_i32_0 = arith.constant 0 : i32
    %c0_i32_1 = arith.constant 0 : i32
    return %c0_i32, %c0_i32_0 : i32, i32
  }
  func.func @transform_3(%arg0: i32) -> (i32, i32) {
    %c0_i32 = arith.constant 0 : i32
    %c0_i32_0 = arith.constant 0 : i32
    %c0_i32_1 = arith.constant 0 : i32
    return %c0_i32, %c0_i32_0 : i32, i32
  }
  func.func @transform_4(%arg0: i32) -> (i32, i32) {
    %c0_i32 = arith.constant 0 : i32
    %c0_i32_0 = arith.constant 0 : i32
    %c0_i32_1 = arith.constant 0 : i32
    return %c0_i32, %c0_i32_0 : i32, i32
  }
  func.func @transform_5(%arg0: i32) -> (i32, i32) {
    %c0_i32 = arith.constant 0 : i32
    %c0_i32_0 = arith.constant 0 : i32
    %c0_i32_1 = arith.constant 0 : i32
    return %c0_i32, %c0_i32_0 : i32, i32
  }
  func.func @transform_6(%arg0: i32) -> (i32, i32) {
    %c0_i32 = arith.constant 0 : i32
    %c0_i32_0 = arith.constant 0 : i32
    %c0_i32_1 = arith.constant 0 : i32
    return %c0_i32, %c0_i32_0 : i32, i32
  }
  func.func @transform_7(%arg0: i32) -> (i32, i32, i32) {
    %c0_i32 = arith.constant 0 : i32
    %c0_i32_0 = arith.constant 0 : i32
    %c0_i32_1 = arith.constant 0 : i32
    %c0_i32_2 = arith.constant 0 : i32
    return %c0_i32, %c0_i32_0, %c0_i32_1 : i32, i32, i32
  }
  func.func @transform_8(%arg0: i32) -> (i32, i32, i32) {
    %c0_i32 = arith.constant 0 : i32
    %c0_i32_0 = arith.constant 0 : i32
    %c0_i32_1 = arith.constant 0 : i32
    %c0_i32_2 = arith.constant 0 : i32
    return %c0_i32, %c0_i32_0, %c0_i32_1 : i32, i32, i32
  }
  func.func @transform_9(%arg0: i32) -> (i32, i32) {
    %c0_i32 = arith.constant 0 : i32
    %c0_i32_0 = arith.constant 0 : i32
    %c0_i32_1 = arith.constant 0 : i32
    return %c0_i32, %c0_i32_0 : i32, i32
  }
  func.func @transform_10(%arg0: i32) -> (i32, i32) {
    %c0_i32 = arith.constant 0 : i32
    %c0_i32_0 = arith.constant 0 : i32
    %c0_i32_1 = arith.constant 0 : i32
    return %c0_i32, %c0_i32_0 : i32, i32
  }
  func.func @transform_11(%arg0: i32) -> (i32, i32, i32) {
    %c0_i32 = arith.constant 0 : i32
    %c0_i32_0 = arith.constant 0 : i32
    %c0_i32_1 = arith.constant 0 : i32
    %c0_i32_2 = arith.constant 0 : i32
    return %c0_i32, %c0_i32_0, %c0_i32_1 : i32, i32, i32
  }
  func.func @transform_12(%arg0: i32) -> (i32, i32) {
    %c0_i32 = arith.constant 0 : i32
    %c0_i32_0 = arith.constant 0 : i32
    %c0_i32_1 = arith.constant 0 : i32
    return %c0_i32, %c0_i32_0 : i32, i32
  }
  func.func @transform_13(%arg0: i32) -> (i32, i32, i32) {
    %c0_i32 = arith.constant 0 : i32
    %c0_i32_0 = arith.constant 0 : i32
    %c0_i32_1 = arith.constant 0 : i32
    %c0_i32_2 = arith.constant 0 : i32
    return %c0_i32, %c0_i32_0, %c0_i32_1 : i32, i32, i32
  }
  func.func @transform_14(%arg0: i32) -> (i32, i32) {
    %c0_i32 = arith.constant 0 : i32
    %c0_i32_0 = arith.constant 0 : i32
    %c0_i32_1 = arith.constant 0 : i32
    return %c0_i32, %c0_i32_0 : i32, i32
  }
  func.func @transform_15(%arg0: i32) -> (i32, i32) {
    %c0_i32 = arith.constant 0 : i32
    %c0_i32_0 = arith.constant 0 : i32
    %c0_i32_1 = arith.constant 0 : i32
    return %c0_i32, %c0_i32_0 : i32, i32
  }
  func.func @transform_16(%arg0: i32) -> (i32, i32) {
    %c0_i32 = arith.constant 0 : i32
    %c0_i32_0 = arith.constant 0 : i32
    %c0_i32_1 = arith.constant 0 : i32
    return %c0_i32, %c0_i32_0 : i32, i32
  }
  func.func @transform_17(%arg0: i32) -> (i32, i32) {
    %c0_i32 = arith.constant 0 : i32
    %c0_i32_0 = arith.constant 0 : i32
    %c0_i32_1 = arith.constant 0 : i32
    return %c0_i32, %c0_i32_0 : i32, i32
  }
  func.func @transform_18(%arg0: i32) -> (i32, i32) {
    %c0_i32 = arith.constant 0 : i32
    %c0_i32_0 = arith.constant 0 : i32
    %c0_i32_1 = arith.constant 0 : i32
    return %c0_i32, %c0_i32_0 : i32, i32
  }
  func.func @transform_19(%arg0: i32) -> (i32, i32, i32) {
    %c0_i32 = arith.constant 0 : i32
    %c0_i32_0 = arith.constant 0 : i32
    %c0_i32_1 = arith.constant 0 : i32
    return %arg0, %c0_i32, %c0_i32_0 : i32, i32, i32
  }
}

</mosaic_0001>

<llo_original>
// kernel: gfnet_forward.1
$region0: #{gfnet_forward.1}
  #allocation0 [shape = 'u32[]', space=smem, size = 0x4, offset = 0x4, fixed_abs, tag = 'smem constant byte address 0x4 - core index']
  #allocation1 [shape = 'u32[144,128]{1,0:T(1,128)}', space=vmem, size = 0x12000, scoped, tag = 'internal scratch']
  %s0 = inlined_call_operand.vmem [shape: f32[2,16,48], index: 0, kind: input, shape index: {}]
  %s1 = inlined_call_operand.vmem [shape: f32[48,32], index: 1, kind: input, shape index: {}]
  %s2 = inlined_call_operand.vmem [shape: f32[16,32], index: 2, kind: input, shape index: {}]
  %s3 = inlined_call_operand.vmem [shape: f32[32,16], index: 3, kind: input, shape index: {}]
  %s4 = inlined_call_operand.vmem [shape: f32[16,32], index: 4, kind: input, shape index: {}]
  %s5 = inlined_call_operand.vmem [shape: f32[2,32], index: 5, kind: input, shape index: {}]
  %s6 = inlined_call_operand.vmem [shape: f32[2,32], index: 6, kind: input, shape index: {}]
  %s7 = inlined_call_operand.vmem [shape: f32[2,16,32], index: 7, kind: input, shape index: {}]
  %s8 = inlined_call_operand.vmem [shape: f32[2,16,32], index: 8, kind: input, shape index: {}]
  %s9 = inlined_call_operand.vmem [shape: f32[2,32], index: 9, kind: input, shape index: {}]
  %s10 = inlined_call_operand.vmem [shape: f32[2,32], index: 10, kind: input, shape index: {}]
  %s11 = inlined_call_operand.vmem [shape: f32[2,32,128], index: 11, kind: input, shape index: {}]
  %s12 = inlined_call_operand.vmem [shape: f32[2,128], index: 12, kind: input, shape index: {}]
  %s13 = inlined_call_operand.vmem [shape: f32[2,128,32], index: 13, kind: input, shape index: {}]
  %s14 = inlined_call_operand.vmem [shape: f32[2,32], index: 14, kind: input, shape index: {}]
  %s15 = inlined_call_operand.vmem [shape: f32[1,32], index: 15, kind: input, shape index: {}]
  %s16 = inlined_call_operand.vmem [shape: f32[1,32], index: 16, kind: input, shape index: {}]
  %s17 = inlined_call_operand.vmem [shape: f32[32,128], index: 17, kind: input, shape index: {}]
  %s18 = inlined_call_operand.vmem [shape: f32[1,128], index: 18, kind: input, shape index: {}]
  %s19 = inlined_call_operand.hbm [shape: f32[2,1,128], index: 19, kind: output, shape index: {}]
  %s20 = sld [smem:[#allocation0]]
  $region109: #{gfnet_forward.1} parent=0
    _
  %s22 = ssub.s32 1, %s20
  %s23 = scalar_select 0, %s22, %s20
  $region1: #{gfnet_forward.1} parent=0
    #allocation2 [shape = 'u8[1024]{0}', space=vmem, size = 0x400, scoped, tag = 'output window, operand 0']
    #allocation3 [shape = 's32[2]{0}', space=sflag, size = 0x8, scoped, tag = 'scoped memory for gfnet_forward.1']
    %24 = vsyncpa [#allocation3], 0
    %s25 = scalar_lea.sflag [#allocation3], 1
    %26 = vsyncpa %s25, 0
    loop: start=0, step=1, limit=4
    $region2: #{gfnet_forward.1} parent=1 // loop_pre_header
      _
    $region3: #{gfnet_forward.1} parent=1 // loop_header
      %s28 = sphi 0, %s32
      %p29 = scmp.ge.s32.totalorder %s28, 4
      %s38 = sphi 0, %s40
      %s41 = sphi 0, %s38
      %s42 = sphi 0, %s41
      %s58 = sphi 0, %s42
      %s62 = sphi 0, %s62
      %s64 = sphi 0, %s62
      %s65 = sphi 0, %s64
      %s79 = sphi 0, %s65
      %s83 = sphi 0, %s83
      %s85 = sphi 0, %s83
      %s86 = sphi 0, %s85
      %s100 = sphi 0, %s86
      %s104 = sphi 0, %s104
      %s106 = sphi 0, %s104
      %s107 = sphi 0, %s106
      %s121 = sphi 0, %s107
      %s125 = sphi 0, %s125
      %s127 = sphi 0, %s125
      %s128 = sphi 0, %s127
      %s142 = sphi 0, %s128
      %s146 = sphi 0, %s146
      %s148 = sphi 0, %s146
      %s149 = sphi 0, %s148
      %s163 = sphi 0, %s149
      %s167 = sphi 0, %s167
      %s169 = sphi 0, %s167
      %s170 = sphi 0, %s169
      %s184 = sphi 0, %s170
      %s188 = sphi 0, %s188
      %s190 = sphi 0, %s188
      %s191 = sphi 0, %s190
      %s205 = sphi 0, %s191
      %s209 = sphi 0, %s209
      %s211 = sphi 0, %s209
      %s212 = sphi 0, %s211
      %s226 = sphi 0, %s212
      %s230 = sphi 0, %s230
      %s232 = sphi 0, %s230
      %s233 = sphi 0, %s232
      %s247 = sphi 0, %s233
      %s251 = sphi 0, %s251
      %s253 = sphi 0, %s251
      %s254 = sphi 0, %s253
      %s268 = sphi 0, %s254
      %s272 = sphi 0, %s272
      %s274 = sphi 0, %s272
      %s275 = sphi 0, %s274
      %s289 = sphi 0, %s275
      %s293 = sphi 0, %s293
      %s295 = sphi 0, %s293
      %s296 = sphi 0, %s295
      %s310 = sphi 0, %s296
      %s314 = sphi 0, %s314
      %s316 = sphi 0, %s314
      %s317 = sphi 0, %s316
      %s331 = sphi 0, %s317
      %s335 = sphi 0, %s335
      %s337 = sphi 0, %s335
      %s338 = sphi 0, %s337
      %s352 = sphi 0, %s338
      %s356 = sphi 0, %s356
      %s358 = sphi 0, %s356
      %s359 = sphi 0, %s358
      %s373 = sphi 0, %s359
      %s377 = sphi 0, %s377
      %s379 = sphi 0, %s377
      %s380 = sphi 0, %s379
      %s394 = sphi 0, %s380
      %s398 = sphi 0, %s398
      %s400 = sphi 0, %s398
      %s401 = sphi 0, %s400
      %s415 = sphi 0, %s401
      %s419 = sphi 0, %s419
      %s421 = sphi 0, %s419
      %s422 = sphi 0, %s421
      %s436 = sphi 0, %s422
      %s442 = sphi 0, %s444
      %s445 = sphi 0, %s442
      %s446 = sphi 0, %s445
      %s462 = sphi 0, %s446
    $region4: #{gfnet_forward.1} parent=1 // loop_header_branch
      %31 = sbr.rel (%p29) target = $region8
    $region5: #{gfnet_forward.1} parent=1 // loop_body
      %s33 = ssub.s32 %s28, 1
      %s34 = ssub.s32 %s28, 2
      %s35 = sadd.s32 %s28, 1
      %s36 = ssub.s32 %s28, %s35
      %p37 = scmp.eq.s32.totalorder %s36, 0
      %s39 = sadd.s32 %s38, 1
      %s40 = scalar_select %p37, %s38, %s39
      %p43 = pneg %p37
      %p44 = scmp.eq.s32.totalorder %s28, 1
      %p45 = por %p43, %p44
      %p46 = scmp.ne.s32.totalorder %s38, %s41
      %p47 = scmp.eq.s32.totalorder %s28, 0
      %p48 = por %p46, %p47
      %p49 = scmp.ne.s32.totalorder %s38, %s41
      %p50 = scmp.eq.s32.totalorder %s33, 1
      %p51 = por %p49, %p50
      %p52 = scmp.ne.s32.totalorder %s41, %s42
      %p53 = scmp.eq.s32.totalorder %s33, 0
      %p54 = por %p52, %p53
      %p55 = scmp.ne.s32.totalorder %s41, %s42
      %p56 = scmp.eq.s32.totalorder %s34, 1
      %p57 = por %p55, %p56
      %p59 = scmp.ne.s32.totalorder %s42, %s58
      %p60 = scmp.eq.s32.totalorder %s34, 0
      %p61 = por %p59, %p60
      %s63 = sadd.s32 %s62, 1
      %p66 = scmp.eq.s32.totalorder %s28, 1
      %p67 = scmp.ne.s32.totalorder %s62, %s64
      %p68 = scmp.eq.s32.totalorder %s28, 0
      %p69 = por %p67, %p68
      %p70 = scmp.ne.s32.totalorder %s62, %s64
      %p71 = scmp.eq.s32.totalorder %s33, 1
      %p72 = por %p70, %p71
      %p73 = scmp.ne.s32.totalorder %s64, %s65
      %p74 = scmp.eq.s32.totalorder %s33, 0
      %p75 = por %p73, %p74
      %p76 = scmp.ne.s32.totalorder %s64, %s65
      %p77 = scmp.eq.s32.totalorder %s34, 1
      %p78 = por %p76, %p77
      %p80 = scmp.ne.s32.totalorder %s65, %s79
      %p81 = scmp.eq.s32.totalorder %s34, 0
      %p82 = por %p80, %p81
      %s84 = sadd.s32 %s83, 1
      %p87 = scmp.eq.s32.totalorder %s28, 1
      %p88 = scmp.ne.s32.totalorder %s83, %s85
      %p89 = scmp.eq.s32.totalorder %s28, 0
      %p90 = por %p88, %p89
      %p91 = scmp.ne.s32.totalorder %s83, %s85
      %p92 = scmp.eq.s32.totalorder %s33, 1
      %p93 = por %p91, %p92
      %p94 = scmp.ne.s32.totalorder %s85, %s86
      %p95 = scmp.eq.s32.totalorder %s33, 0
      %p96 = por %p94, %p95
      %p97 = scmp.ne.s32.totalorder %s85, %s86
      %p98 = scmp.eq.s32.totalorder %s34, 1
      %p99 = por %p97, %p98
      %p101 = scmp.ne.s32.totalorder %s86, %s100
      %p102 = scmp.eq.s32.totalorder %s34, 0
      %p103 = por %p101, %p102
      %s105 = sadd.s32 %s104, 1
      %p108 = scmp.eq.s32.totalorder %s28, 1
      %p109 = scmp.ne.s32.totalorder %s104, %s106
      %p110 = scmp.eq.s32.totalorder %s28, 0
      %p111 = por %p109, %p110
      %p112 = scmp.ne.s32.totalorder %s104, %s106
      %p113 = scmp.eq.s32.totalorder %s33, 1
      %p114 = por %p112, %p113
      %p115 = scmp.ne.s32.totalorder %s106, %s107
      %p116 = scmp.eq.s32.totalorder %s33, 0
      %p117 = por %p115, %p116
      %p118 = scmp.ne.s32.totalorder %s106, %s107
      %p119 = scmp.eq.s32.totalorder %s34, 1
      %p120 = por %p118, %p119
      %p122 = scmp.ne.s32.totalorder %s107, %s121
      %p123 = scmp.eq.s32.totalorder %s34, 0
      %p124 = por %p122, %p123
      %s126 = sadd.s32 %s125, 1
      %p129 = scmp.eq.s32.totalorder %s28, 1
      %p130 = scmp.ne.s32.totalorder %s125, %s127
      %p131 = scmp.eq.s32.totalorder %s28, 0
      %p132 = por %p130, %p131
      %p133 = scmp.ne.s32.totalorder %s125, %s127
      %p134 = scmp.eq.s32.totalorder %s33, 1
      %p135 = por %p133, %p134
      %p136 = scmp.ne.s32.totalorder %s127, %s128
      %p137 = scmp.eq.s32.totalorder %s33, 0
      %p138 = por %p136, %p137
      %p139 = scmp.ne.s32.totalorder %s127, %s128
      %p140 = scmp.eq.s32.totalorder %s34, 1
      %p141 = por %p139, %p140
      %p143 = scmp.ne.s32.totalorder %s128, %s142
      %p144 = scmp.eq.s32.totalorder %s34, 0
      %p145 = por %p143, %p144
      %s147 = sadd.s32 %s146, 1
      %p150 = scmp.eq.s32.totalorder %s28, 1
      %p151 = scmp.ne.s32.totalorder %s146, %s148
      %p152 = scmp.eq.s32.totalorder %s28, 0
      %p153 = por %p151, %p152
      %p154 = scmp.ne.s32.totalorder %s146, %s148
      %p155 = scmp.eq.s32.totalorder %s33, 1
      %p156 = por %p154, %p155
      %p157 = scmp.ne.s32.totalorder %s148, %s149
      %p158 = scmp.eq.s32.totalorder %s33, 0
      %p159 = por %p157, %p158
      %p160 = scmp.ne.s32.totalorder %s148, %s149
      %p161 = scmp.eq.s32.totalorder %s34, 1
      %p162 = por %p160, %p161
      %p164 = scmp.ne.s32.totalorder %s149, %s163
      %p165 = scmp.eq.s32.totalorder %s34, 0
      %p166 = por %p164, %p165
      %s168 = sadd.s32 %s167, 1
      %p171 = scmp.eq.s32.totalorder %s28, 1
      %p172 = scmp.ne.s32.totalorder %s167, %s169
      %p173 = scmp.eq.s32.totalorder %s28, 0
      %p174 = por %p172, %p173
      %p175 = scmp.ne.s32.totalorder %s167, %s169
      %p176 = scmp.eq.s32.totalorder %s33, 1
      %p177 = por %p175, %p176
      %p178 = scmp.ne.s32.totalorder %s169, %s170
      %p179 = scmp.eq.s32.totalorder %s33, 0
      %p180 = por %p178, %p179
      %p181 = scmp.ne.s32.totalorder %s169, %s170
      %p182 = scmp.eq.s32.totalorder %s34, 1
      %p183 = por %p181, %p182
      %p185 = scmp.ne.s32.totalorder %s170, %s184
      %p186 = scmp.eq.s32.totalorder %s34, 0
      %p187 = por %p185, %p186
      %s189 = sadd.s32 %s188, 1
      %p192 = scmp.eq.s32.totalorder %s28, 1
      %p193 = scmp.ne.s32.totalorder %s188, %s190
      %p194 = scmp.eq.s32.totalorder %s28, 0
      %p195 = por %p193, %p194
      %p196 = scmp.ne.s32.totalorder %s188, %s190
      %p197 = scmp.eq.s32.totalorder %s33, 1
      %p198 = por %p196, %p197
      %p199 = scmp.ne.s32.totalorder %s190, %s191
      %p200 = scmp.eq.s32.totalorder %s33, 0
      %p201 = por %p199, %p200
      %p202 = scmp.ne.s32.totalorder %s190, %s191
      %p203 = scmp.eq.s32.totalorder %s34, 1
      %p204 = por %p202, %p203
      %p206 = scmp.ne.s32.totalorder %s191, %s205
      %p207 = scmp.eq.s32.totalorder %s34, 0
      %p208 = por %p206, %p207
      %s210 = sadd.s32 %s209, 1
      %p213 = scmp.eq.s32.totalorder %s28, 1
      %p214 = scmp.ne.s32.totalorder %s209, %s211
      %p215 = scmp.eq.s32.totalorder %s28, 0
      %p216 = por %p214, %p215
      %p217 = scmp.ne.s32.totalorder %s209, %s211
      %p218 = scmp.eq.s32.totalorder %s33, 1
      %p219 = por %p217, %p218
      %p220 = scmp.ne.s32.totalorder %s211, %s212
      %p221 = scmp.eq.s32.totalorder %s33, 0
      %p222 = por %p220, %p221
      %p223 = scmp.ne.s32.totalorder %s211, %s212
      %p224 = scmp.eq.s32.totalorder %s34, 1
      %p225 = por %p223, %p224
      %p227 = scmp.ne.s32.totalorder %s212, %s226
      %p228 = scmp.eq.s32.totalorder %s34, 0
      %p229 = por %p227, %p228
      %s231 = sadd.s32 %s230, 1
      %p234 = scmp.eq.s32.totalorder %s28, 1
      %p235 = scmp.ne.s32.totalorder %s230, %s232
      %p236 = scmp.eq.s32.totalorder %s28, 0
      %p237 = por %p235, %p236
      %p238 = scmp.ne.s32.totalorder %s230, %s232
      %p239 = scmp.eq.s32.totalorder %s33, 1
      %p240 = por %p238, %p239
      %p241 = scmp.ne.s32.totalorder %s232, %s233
      %p242 = scmp.eq.s32.totalorder %s33, 0
      %p243 = por %p241, %p242
      %p244 = scmp.ne.s32.totalorder %s232, %s233
      %p245 = scmp.eq.s32.totalorder %s34, 1
      %p246 = por %p244, %p245
      %p248 = scmp.ne.s32.totalorder %s233, %s247
      %p249 = scmp.eq.s32.totalorder %s34, 0
      %p250 = por %p248, %p249
      %s252 = sadd.s32 %s251, 1
      %p255 = scmp.eq.s32.totalorder %s28, 1
      %p256 = scmp.ne.s32.totalorder %s251, %s253
      %p257 = scmp.eq.s32.totalorder %s28, 0
      %p258 = por %p256, %p257
      %p259 = scmp.ne.s32.totalorder %s251, %s253
      %p260 = scmp.eq.s32.totalorder %s33, 1
      %p261 = por %p259, %p260
      %p262 = scmp.ne.s32.totalorder %s253, %s254
      %p263 = scmp.eq.s32.totalorder %s33, 0
      %p264 = por %p262, %p263
      %p265 = scmp.ne.s32.totalorder %s253, %s254
      %p266 = scmp.eq.s32.totalorder %s34, 1
      %p267 = por %p265, %p266
      %p269 = scmp.ne.s32.totalorder %s254, %s268
      %p270 = scmp.eq.s32.totalorder %s34, 0
      %p271 = por %p269, %p270
      %s273 = sadd.s32 %s272, 1
      %p276 = scmp.eq.s32.totalorder %s28, 1
      %p277 = scmp.ne.s32.totalorder %s272, %s274
      %p278 = scmp.eq.s32.totalorder %s28, 0
      %p279 = por %p277, %p278
      %p280 = scmp.ne.s32.totalorder %s272, %s274
      %p281 = scmp.eq.s32.totalorder %s33, 1
      %p282 = por %p280, %p281
      %p283 = scmp.ne.s32.totalorder %s274, %s275
      %p284 = scmp.eq.s32.totalorder %s33, 0
      %p285 = por %p283, %p284
      %p286 = scmp.ne.s32.totalorder %s274, %s275
      %p287 = scmp.eq.s32.totalorder %s34, 1
      %p288 = por %p286, %p287
      %p290 = scmp.ne.s32.totalorder %s275, %s289
      %p291 = scmp.eq.s32.totalorder %s34, 0
      %p292 = por %p290, %p291
      %s294 = sadd.s32 %s293, 1
      %p297 = scmp.eq.s32.totalorder %s28, 1
      %p298 = scmp.ne.s32.totalorder %s293, %s295
      %p299 = scmp.eq.s32.totalorder %s28, 0
      %p300 = por %p298, %p299
      %p301 = scmp.ne.s32.totalorder %s293, %s295
      %p302 = scmp.eq.s32.totalorder %s33, 1
      %p303 = por %p301, %p302
      %p304 = scmp.ne.s32.totalorder %s295, %s296
      %p305 = scmp.eq.s32.totalorder %s33, 0
      %p306 = por %p304, %p305
      %p307 = scmp.ne.s32.totalorder %s295, %s296
      %p308 = scmp.eq.s32.totalorder %s34, 1
      %p309 = por %p307, %p308
      %p311 = scmp.ne.s32.totalorder %s296, %s310
      %p312 = scmp.eq.s32.totalorder %s34, 0
      %p313 = por %p311, %p312
      %s315 = sadd.s32 %s314, 1
      %p318 = scmp.eq.s32.totalorder %s28, 1
      %p319 = scmp.ne.s32.totalorder %s314, %s316
      %p320 = scmp.eq.s32.totalorder %s28, 0
      %p321 = por %p319, %p320
      %p322 = scmp.ne.s32.totalorder %s314, %s316
      %p323 = scmp.eq.s32.totalorder %s33, 1
      %p324 = por %p322, %p323
      %p325 = scmp.ne.s32.totalorder %s316, %s317
      %p326 = scmp.eq.s32.totalorder %s33, 0
      %p327 = por %p325, %p326
      %p328 = scmp.ne.s32.totalorder %s316, %s317
      %p329 = scmp.eq.s32.totalorder %s34, 1
      %p330 = por %p328, %p329
      %p332 = scmp.ne.s32.totalorder %s317, %s331
      %p333 = scmp.eq.s32.totalorder %s34, 0
      %p334 = por %p332, %p333
      %s336 = sadd.s32 %s335, 1
      %p339 = scmp.eq.s32.totalorder %s28, 1
      %p340 = scmp.ne.s32.totalorder %s335, %s337
      %p341 = scmp.eq.s32.totalorder %s28, 0
      %p342 = por %p340, %p341
      %p343 = scmp.ne.s32.totalorder %s335, %s337
      %p344 = scmp.eq.s32.totalorder %s33, 1
      %p345 = por %p343, %p344
      %p346 = scmp.ne.s32.totalorder %s337, %s338
      %p347 = scmp.eq.s32.totalorder %s33, 0
      %p348 = por %p346, %p347
      %p349 = scmp.ne.s32.totalorder %s337, %s338
      %p350 = scmp.eq.s32.totalorder %s34, 1
      %p351 = por %p349, %p350
      %p353 = scmp.ne.s32.totalorder %s338, %s352
      %p354 = scmp.eq.s32.totalorder %s34, 0
      %p355 = por %p353, %p354
      %s357 = sadd.s32 %s356, 1
      %p360 = scmp.eq.s32.totalorder %s28, 1
      %p361 = scmp.ne.s32.totalorder %s356, %s358
      %p362 = scmp.eq.s32.totalorder %s28, 0
      %p363 = por %p361, %p362
      %p364 = scmp.ne.s32.totalorder %s356, %s358
      %p365 = scmp.eq.s32.totalorder %s33, 1
      %p366 = por %p364, %p365
      %p367 = scmp.ne.s32.totalorder %s358, %s359
      %p368 = scmp.eq.s32.totalorder %s33, 0
      %p369 = por %p367, %p368
      %p370 = scmp.ne.s32.totalorder %s358, %s359
      %p371 = scmp.eq.s32.totalorder %s34, 1
      %p372 = por %p370, %p371
      %p374 = scmp.ne.s32.totalorder %s359, %s373
      %p375 = scmp.eq.s32.totalorder %s34, 0
      %p376 = por %p374, %p375
      %s378 = sadd.s32 %s377, 1
      %p381 = scmp.eq.s32.totalorder %s28, 1
      %p382 = scmp.ne.s32.totalorder %s377, %s379
      %p383 = scmp.eq.s32.totalorder %s28, 0
      %p384 = por %p382, %p383
      %p385 = scmp.ne.s32.totalorder %s377, %s379
      %p386 = scmp.eq.s32.totalorder %s33, 1
      %p387 = por %p385, %p386
      %p388 = scmp.ne.s32.totalorder %s379, %s380
      %p389 = scmp.eq.s32.totalorder %s33, 0
      %p390 = por %p388, %p389
      %p391 = scmp.ne.s32.totalorder %s379, %s380
      %p392 = scmp.eq.s32.totalorder %s34, 1
      %p393 = por %p391, %p392
      %p395 = scmp.ne.s32.totalorder %s380, %s394
      %p396 = scmp.eq.s32.totalorder %s34, 0
      %p397 = por %p395, %p396
      %s399 = sadd.s32 %s398, 1
      %p402 = scmp.eq.s32.totalorder %s28, 1
      %p403 = scmp.ne.s32.totalorder %s398, %s400
      %p404 = scmp.eq.s32.totalorder %s28, 0
      %p405 = por %p403, %p404
      %p406 = scmp.ne.s32.totalorder %s398, %s400
      %p407 = scmp.eq.s32.totalorder %s33, 1
      %p408 = por %p406, %p407
      %p409 = scmp.ne.s32.totalorder %s400, %s401
      %p410 = scmp.eq.s32.totalorder %s33, 0
      %p411 = por %p409, %p410
      %p412 = scmp.ne.s32.totalorder %s400, %s401
      %p413 = scmp.eq.s32.totalorder %s34, 1
      %p414 = por %p412, %p413
      %p416 = scmp.ne.s32.totalorder %s401, %s415
      %p417 = scmp.eq.s32.totalorder %s34, 0
      %p418 = por %p416, %p417
      %s420 = sadd.s32 %s419, 1
      %p423 = scmp.eq.s32.totalorder %s28, 1
      %p424 = scmp.ne.s32.totalorder %s419, %s421
      %p425 = scmp.eq.s32.totalorder %s28, 0
      %p426 = por %p424, %p425
      %p427 = scmp.ne.s32.totalorder %s419, %s421
      %p428 = scmp.eq.s32.totalorder %s33, 1
      %p429 = por %p427, %p428
      %p430 = scmp.ne.s32.totalorder %s421, %s422
      %p431 = scmp.eq.s32.totalorder %s33, 0
      %p432 = por %p430, %p431
      %p433 = scmp.ne.s32.totalorder %s421, %s422
      %p434 = scmp.eq.s32.totalorder %s34, 1
      %p435 = por %p433, %p434
      %p437 = scmp.ne.s32.totalorder %s422, %s436
      %p438 = scmp.eq.s32.totalorder %s34, 0
      %p439 = por %p437, %p438
      %s440 = ssub.s32 %s28, %s35
      %p441 = scmp.eq.s32.totalorder %s440, 0
      %s443 = sadd.s32 %s442, 1
      %s444 = scalar_select %p441, %s442, %s443
      %p447 = pneg %p441
      %p448 = scmp.eq.s32.totalorder %s28, 1
      %p449 = por %p447, %p448
      %p450 = scmp.ne.s32.totalorder %s442, %s445
      %p451 = scmp.eq.s32.totalorder %s28, 0
      %p452 = por %p450, %p451
      %p453 = scmp.ne.s32.totalorder %s442, %s445
      %p454 = scmp.eq.s32.totalorder %s33, 1
      %p455 = por %p453, %p454
      %p456 = scmp.ne.s32.totalorder %s445, %s446
      %p457 = scmp.eq.s32.totalorder %s33, 0
      %p458 = por %p456, %p457
      %p459 = scmp.ne.s32.totalorder %s445, %s446
      %p460 = scmp.eq.s32.totalorder %s34, 1
      %p461 = por %p459, %p460
      %p463 = scmp.ne.s32.totalorder %s446, %s462
      %p464 = scmp.eq.s32.totalorder %s34, 0
      %p465 = por %p463, %p464
      %p466 = scmp.le.s32.totalorder 1, %s28
      %p467 = scmp.lt.s32.totalorder %s28, 3
      %p468 = pnand %p466, %p467
      %p469 = pneg %p468
      // Predicated region
      $region9: #{gfnet_forward.1} parent=5 // pred_check
        _
      $region10: #{gfnet_forward.1} parent=5 // pred_check_branch
        %471 = sbr.rel (%p468) target = $region12
      $region11: #{gfnet_forward.1} parent=5 // pred_region
        %s472 = ssub.s32 %s28, 1
        // Predicated region
        $region13: #{gfnet_forward.1} parent=11 // pred_check
          %p473 = pneg %p75
        $region14: #{gfnet_forward.1} parent=11 // pred_check_branch
          %475 = sbr.rel (%p473) target = $region16
        $region15: #{gfnet_forward.1} parent=11 // pred_region
          _
        $region16: #{gfnet_forward.1} parent=11 // pred_fallthru
          _
        // Predicated region
        $region17: #{gfnet_forward.1} parent=11 // pred_check
          %p476 = pneg %p96
        $region18: #{gfnet_forward.1} parent=11 // pred_check_branch
          %478 = sbr.rel (%p476) target = $region20
        $region19: #{gfnet_forward.1} parent=11 // pred_region
          _
        $region20: #{gfnet_forward.1} parent=11 // pred_fallthru
          _
        // Predicated region
        $region21: #{gfnet_forward.1} parent=11 // pred_check
          %p479 = pneg %p117
        $region22: #{gfnet_forward.1} parent=11 // pred_check_branch
          %481 = sbr.rel (%p479) target = $region24
        $region23: #{gfnet_forward.1} parent=11 // pred_region
          _
        $region24: #{gfnet_forward.1} parent=11 // pred_fallthru
          _
        // Predicated region
        $region25: #{gfnet_forward.1} parent=11 // pred_check
          %p482 = pneg %p138
        $region26: #{gfnet_forward.1} parent=11 // pred_check_branch
          %484 = sbr.rel (%p482) target = $region28
        $region27: #{gfnet_forward.1} parent=11 // pred_region
          _
        $region28: #{gfnet_forward.1} parent=11 // pred_fallthru
          _
        // Predicated region
        $region29: #{gfnet_forward.1} parent=11 // pred_check
          %p485 = pneg %p159
        $region30: #{gfnet_forward.1} parent=11 // pred_check_branch
          %487 = sbr.rel (%p485) target = $region32
        $region31: #{gfnet_forward.1} parent=11 // pred_region
          _
        $region32: #{gfnet_forward.1} parent=11 // pred_fallthru
          _
        // Predicated region
        $region33: #{gfnet_forward.1} parent=11 // pred_check
          %p488 = pneg %p180
        $region34: #{gfnet_forward.1} parent=11 // pred_check_branch
          %490 = sbr.rel (%p488) target = $region36
        $region35: #{gfnet_forward.1} parent=11 // pred_region
          _
        $region36: #{gfnet_forward.1} parent=11 // pred_fallthru
          _
        // Predicated region
        $region37: #{gfnet_forward.1} parent=11 // pred_check
          %p491 = pneg %p201
        $region38: #{gfnet_forward.1} parent=11 // pred_check_branch
          %493 = sbr.rel (%p491) target = $region40
        $region39: #{gfnet_forward.1} parent=11 // pred_region
          _
        $region40: #{gfnet_forward.1} parent=11 // pred_fallthru
          _
        // Predicated region
        $region41: #{gfnet_forward.1} parent=11 // pred_check
          %p494 = pneg %p222
        $region42: #{gfnet_forward.1} parent=11 // pred_check_branch
          %496 = sbr.rel (%p494) target = $region44
        $region43: #{gfnet_forward.1} parent=11 // pred_region
          _
        $region44: #{gfnet_forward.1} parent=11 // pred_fallthru
          _
        // Predicated region
        $region45: #{gfnet_forward.1} parent=11 // pred_check
          %p497 = pneg %p243
        $region46: #{gfnet_forward.1} parent=11 // pred_check_branch
          %499 = sbr.rel (%p497) target = $region48
        $region47: #{gfnet_forward.1} parent=11 // pred_region
          _
        $region48: #{gfnet_forward.1} parent=11 // pred_fallthru
          _
        // Predicated region
        $region49: #{gfnet_forward.1} parent=11 // pred_check
          %p500 = pneg %p264
        $region50: #{gfnet_forward.1} parent=11 // pred_check_branch
          %502 = sbr.rel (%p500) target = $region52
        $region51: #{gfnet_forward.1} parent=11 // pred_region
          _
        $region52: #{gfnet_forward.1} parent=11 // pred_fallthru
          _
        // Predicated region
        $region53: #{gfnet_forward.1} parent=11 // pred_check
          %p503 = pneg %p285
        $region54: #{gfnet_forward.1} parent=11 // pred_check_branch
          %505 = sbr.rel (%p503) target = $region56
        $region55: #{gfnet_forward.1} parent=11 // pred_region
          _
        $region56: #{gfnet_forward.1} parent=11 // pred_fallthru
          _
        // Predicated region
        $region57: #{gfnet_forward.1} parent=11 // pred_check
          %p506 = pneg %p306
        $region58: #{gfnet_forward.1} parent=11 // pred_check_branch
          %508 = sbr.rel (%p506) target = $region60
        $region59: #{gfnet_forward.1} parent=11 // pred_region
          _
        $region60: #{gfnet_forward.1} parent=11 // pred_fallthru
          _
        // Predicated region
        $region61: #{gfnet_forward.1} parent=11 // pred_check
          %p509 = pneg %p327
        $region62: #{gfnet_forward.1} parent=11 // pred_check_branch
          %511 = sbr.rel (%p509) target = $region64
        $region63: #{gfnet_forward.1} parent=11 // pred_region
          _
        $region64: #{gfnet_forward.1} parent=11 // pred_fallthru
          _
        // Predicated region
        $region65: #{gfnet_forward.1} parent=11 // pred_check
          %p512 = pneg %p348
        $region66: #{gfnet_forward.1} parent=11 // pred_check_branch
          %514 = sbr.rel (%p512) target = $region68
        $region67: #{gfnet_forward.1} parent=11 // pred_region
          _
        $region68: #{gfnet_forward.1} parent=11 // pred_fallthru
          _
        // Predicated region
        $region69: #{gfnet_forward.1} parent=11 // pred_check
          %p515 = pneg %p369
        $region70: #{gfnet_forward.1} parent=11 // pred_check_branch
          %517 = sbr.rel (%p515) target = $region72
        $region71: #{gfnet_forward.1} parent=11 // pred_region
          _
        $region72: #{gfnet_forward.1} parent=11 // pred_fallthru
          _
        // Predicated region
        $region73: #{gfnet_forward.1} parent=11 // pred_check
          %p518 = pneg %p390
        $region74: #{gfnet_forward.1} parent=11 // pred_check_branch
          %520 = sbr.rel (%p518) target = $region76
        $region75: #{gfnet_forward.1} parent=11 // pred_region
          _
        $region76: #{gfnet_forward.1} parent=11 // pred_fallthru
          _
        // Predicated region
        $region77: #{gfnet_forward.1} parent=11 // pred_check
          %p521 = pneg %p411
        $region78: #{gfnet_forward.1} parent=11 // pred_check_branch
          %523 = sbr.rel (%p521) target = $region80
        $region79: #{gfnet_forward.1} parent=11 // pred_region
          _
        $region80: #{gfnet_forward.1} parent=11 // pred_fallthru
          _
        // Predicated region
        $region81: #{gfnet_forward.1} parent=11 // pred_check
          %p524 = pneg %p432
        $region82: #{gfnet_forward.1} parent=11 // pred_check_branch
          %526 = sbr.rel (%p524) target = $region84
        $region83: #{gfnet_forward.1} parent=11 // pred_region
          _
        $region84: #{gfnet_forward.1} parent=11 // pred_fallthru
          _
      $region12: #{gfnet_forward.1} parent=5 // pred_fallthru
        _
      %p527 = scmp.lt.s32.totalorder %s28, 2
      // Predicated region
      $region85: #{gfnet_forward.1} parent=5 // pred_check
        %p528 = pneg %p527
      $region86: #{gfnet_forward.1} parent=5 // pred_check_branch
        %530 = sbr.rel (%p528) target = $region88
      $region87: #{gfnet_forward.1} parent=5 // pred_region
        // Predicated region
        $region89: #{gfnet_forward.1} parent=87 // pred_check
          %p531 = pneg %p48
        $region90: #{gfnet_forward.1} parent=87 // pred_check_branch
          %533 = sbr.rel (%p531) target = $region92
        $region91: #{gfnet_forward.1} parent=87 // pred_region
          %p534 = scmp.lt.s32.totalorder %s28, 1
          %s535 = scalar_select %p534, %s28, 1
          %s536 = smul.addr %s535, 2
          %s537 = smul.addr %s536, 8
          %s538 = scalar_lea.vmem %s0, %s537
        $region92: #{gfnet_forward.1} parent=87 // pred_fallthru
          _
      $region88: #{gfnet_forward.1} parent=5 // pred_fallthru
        _
      %p539 = scmp.le.s32.totalorder 1, %s28
      %p540 = scmp.lt.s32.totalorder %s28, 3
      %p541 = pnand %p539, %p540
      %p542 = pneg %p541
      // Predicated region
      $region93: #{gfnet_forward.1} parent=5 // pred_check
        _
      $region94: #{gfnet_forward.1} parent=5 // pred_check_branch
        %544 = sbr.rel (%p541) target = $region96
      $region95: #{gfnet_forward.1} parent=5 // pred_region
        %s545 = ssub.s32 %s28, 1
        %p546 = scmp.lt.s32.totalorder %s33, 1
        %s547 = scalar_select %p546, %s33, 1
        %s548 = smul.addr %s547, 2
        %s549 = smul.addr %s548, 8
        %s550 = scalar_lea.vmem %s0, %s549
        %p551 = pneg %p54
        %p552 = pneg %p51
        %p553 = pneg %p75
        %p554 = pneg %p72
        %p555 = pneg %p96
        %p556 = pneg %p93
        %p557 = pneg %p117
        %p558 = pneg %p114
        %p559 = pneg %p138
        %p560 = pneg %p135
        %p561 = pneg %p159
        %p562 = pneg %p156
        %p563 = pneg %p180
        %p564 = pneg %p177
        %p565 = pneg %p201
        %p566 = pneg %p198
        %p567 = pneg %p222
        %p568 = pneg %p219
        %p569 = pneg %p243
        %p570 = pneg %p240
        %p571 = pneg %p264
        %p572 = pneg %p261
        %p573 = pneg %p285
        %p574 = pneg %p282
        %p575 = pneg %p306
        %p576 = pneg %p303
        %p577 = pneg %p327
        %p578 = pneg %p324
        %p579 = pneg %p348
        %p580 = pneg %p345
        %p581 = pneg %p369
        %p582 = pneg %p366
        %p583 = pneg %p390
        %p584 = pneg %p387
        %p585 = pneg %p411
        %p586 = pneg %p408
        %p587 = pneg %p432
        %p588 = pneg %p429
        %p589 = pneg %p458
        %p590 = pneg %p455
        %s591 = sand.u32 %s445, 1
        %s592 = scalar_lea.sflag [#allocation3], %s591
        %s593 = sand.u32 %s445, 1
        %s594 = scalar_lea.vmem [#allocation2], %s593
        %p595 = scmp.lt.s32.totalorder %s33, 1
        %s596 = scalar_select %p595, %s33, 1
        %s597 = smul.addr %s596, 2
        %s598 = smul.addr %s597, 8
        %s599 = scalar_lea.vmem %s0, %s598
        %v600 = vld [vmem:[%s599] sm:$0xff]
        %v601 = vld [vmem:[%s599 + $0x8] sm:$0xff]
        %v602 = vld [vmem:[%s1] sm:$0xff]
        %v603 = vld [vmem:[%s1 + $0x8] sm:$0xff]
        %v604 = vld [vmem:[%s1 + $0x10] sm:$0xff]
        %v605 = vld [vmem:[%s1 + $0x18] sm:$0xff]
        %v606 = vld [vmem:[%s1 + $0x20] sm:$0xff]
        %v607 = vld [vmem:[%s1 + $0x28] sm:$0xff]
        %v608 = vld [vmem:[%s2] sm:$0xff]
        %v609 = vld [vmem:[%s2 + $0x8] sm:$0xff]
        %vm610 = vcmask 392192
        %v612 = vsel %vm610, %v600, 0
        %v615 = vsel %vm610, %v601, 0
        %617 = vmatprep.subr.mxu0 0.0
        %618 = vmatpush1.msra.mxu0 %v602
        %619 = vmatprep.subr.mxu0 0.0
        %620 = vmatpush1.msra.mxu0 %v603
        %621 = vmatprep.subr.mxu0 0.0
        %622 = vmatpush1.msra.mxu0 %v604
        %623 = vmatprep.subr.mxu0 0.0
        %624 = vmatpush1.msra.mxu0 %v605
        %625 = vmatprep.subr.mxu0 0.0
        %626 = vmatpush1.msra.mxu0 %v606
        %627 = vmatprep.subr.mxu0 0.0
        %628 = vmatpush1.msra.mxu0 %v607
        %629 = vmatprep.subr.mxu0 0.0
        %630 = vmatpush1.msra.mxu0 0.0
        %631 = vmatprep.subr.mxu0 0.0
        %632 = vmatpush1.msra.mxu0 0.0
        %633 = vmatprep.subr.mxu0 0.0
        %634 = vmatpush1.msra.mxu0 0.0
        %635 = vmatprep.subr.mxu0 0.0
        %636 = vmatpush1.msra.mxu0 0.0
        %637 = vmatprep.subr.mxu0 0.0
        %638 = vmatpush1.msra.mxu0 0.0
        %639 = vmatprep.subr.mxu0 0.0
        %640 = vmatpush1.msra.mxu0 0.0
        %641 = vmatprep.subr.mxu0 0.0
        %642 = vmatpush1.msra.mxu0 0.0
        %643 = vmatprep.subr.mxu0 0.0
        %644 = vmatpush1.msra.mxu0 0.0
        %645 = vmatprep.subr.mxu0 0.0
        %646 = vmatpush1.msra.mxu0 0.0
        %647 = vmatprep.subr.mxu0 0.0
        %648 = vmatpush1.msra.mxu0 0.0
        %649 = vmatprep.subr.mxu0 0.0
        %650 = vmatpush1.msra.mxu0 0.0
        %651 = vmatprep.subr.mxu0 0.0
        %652 = vmatpush1.msra.mxu0 0.0
        %653 = vmatprep.subr.mxu0 0.0
        %654 = vmatpush1.msra.mxu0 0.0
        %655 = vmatprep.subr.mxu0 0.0
        %656 = vmatpush1.msra.mxu0 0.0
        %657 = vmatprep.subr.mxu0 0.0
        %658 = vmatpush1.msra.mxu0 0.0
        %659 = vmatprep.subr.mxu0 0.0
        %660 = vmatpush1.msra.mxu0 0.0
        %661 = vmatprep.subr.mxu0 0.0
        %662 = vmatpush1.msra.mxu0 0.0
        %663 = vmatprep.subr.mxu0 0.0
        %664 = vmatpush1.msra.mxu0 0.0
        %665 = vmatprep.subr.mxu0 0.0
        %666 = vmatpush1.msra.mxu0 0.0
        %667 = vmatprep.subr.mxu0 0.0
        %668 = vmatpush1.msra.mxu0 0.0
        %669 = vmatprep.subr.mxu0 0.0
        %670 = vmatpush1.msra.mxu0 0.0
        %671 = vmatprep.subr.mxu0 0.0
        %672 = vmatpush1.msra.mxu0 0.0
        %673 = vmatprep.subr.mxu0 0.0
        %674 = vmatpush1.msra.mxu0 0.0
        %675 = vmatprep.subr.mxu0 0.0
        %676 = vmatpush1.msra.mxu0 0.0
        %677 = vmatprep.subr.mxu0 0.0
        %678 = vmatpush1.msra.mxu0 0.0
        %679 = vmatprep.subr.mxu0 0.0
        %680 = vmatpush1.msra.mxu0 0.0
        %681 = vmatprep.mubr.f32.mxu0 0.0
        %682 = vmatmul.mubr.f32.gmra.mrb[0].mxu0 %v612
        %v683 = vpop.f32.mrb[0].mxu0
        %v684 = vadd.f32 %v608, %v683
        %v685 = vpop.f32.mrb[0].mxu0
        %686 = vmatprep.mubr.f32.mxu0 0.0
        %687 = vmatmul.mubr.f32.gmra.mrb[0].mxu0 %v615
        %v688 = vpop.f32.mrb[0].mxu0
        %v689 = vadd.f32 %v609, %v688
        %v690 = vpop.f32.mrb[0].mxu0
        %691 = vdwg.mxu0
        %v692 = vld [vmem:[%s3] sm:$0xff]
        %v693 = vld [vmem:[%s3 + $0x8] sm:$0xff]
        %v694 = vld [vmem:[%s3 + $0x10] sm:$0xff]
        %v695 = vld [vmem:[%s3 + $0x18] sm:$0xff]
        %v696 = vld [vmem:[%s4] sm:$0xff]
        %v697 = vld [vmem:[%s4 + $0x8] sm:$0xff]
        %v698 = vld [vmem:[%s5] sm:$0x1]
        %v699 = vld [vmem:[%s6] sm:$0x1]
        %vm700 = vcmask 261120
        %v701 = vsel %vm700, %v684, 0.0
        %702 = vadd.xlane.f32.xlu0 %v701
        %v703 = vpop.xlane.xlu0 %702
        %v704 = vsel %vm700, %v689, 0.0
        %705 = vadd.xlane.f32.xlu0 %v704
        %v706 = vpop.xlane.xlu0 %705
        %v707 = vrcp.pop 32.0
        %v708 = vmul.f32 %v703, %v707
        %v709 = vmul.f32 %v706, %v707
        %v710 = vsub.f32 %v684, %v708
        %v711 = vsub.f32 %v689, %v709
        %v712 = vmul.f32 %v710, %v710
        %v713 = vmul.f32 %v711, %v711
        %v714 = vsel %vm700, %v712, 0.0
        %715 = vadd.xlane.f32.xlu0 %v714
        %v716 = vpop.xlane.xlu0 %715
        %v717 = vsel %vm700, %v713, 0.0
        %718 = vadd.xlane.f32.xlu0 %v717
        %v719 = vpop.xlane.xlu0 %718
        %v720 = vmul.f32 %v716, %v707
        %v721 = vmul.f32 %v719, %v707
        %v722 = vadd.f32 %v720, 1e-06
        %v723 = vadd.f32 %v721, 1e-06
        %v724 = vrsqrt.pop %v722
        %v725 = vrsqrt.pop %v723
        %v726 = vmul.f32 %v710, %v724
        %v727 = vmul.f32 %v711, %v725
        %v728 = vlaneseq
        %v729 = vshrl.u32 %v728, 7
        %v730 = vsub.s32 0, %v729
        %v731 = vrot.slane %v698, %v730
        %v732 = vmul.f32 %v726, %v731
        %v733 = vmul.f32 %v727, %v731
        %v734 = vlaneseq
        %v735 = vshrl.u32 %v734, 7
        %v736 = vsub.s32 0, %v735
        %v737 = vrot.slane %v699, %v736
        %v738 = vadd.f32 %v732, %v737
        %v739 = vadd.f32 %v733, %v737
        %vm740 = vcmask 130048
        %v742 = vsel %vm740, %v692, 0
        %v745 = vsel %vm740, %v693, 0
        %v748 = vsel %vm740, %v694, 0
        %v751 = vsel %vm740, %v695, 0
        %753 = vmatprep.subr.mxu0 0.0
        %754 = vmatpush1.msra.mxu0 %v738
        %755 = vmatprep.subr.mxu0 0.0
        %756 = vmatpush1.msra.mxu0 %v739
        %757 = vmatprep.subr.mxu0 0.0
        %758 = vmatpush1.msra.mxu0 0.0
        %759 = vmatprep.subr.mxu0 0.0
        %760 = vmatpush1.msra.mxu0 0.0
        %761 = vmatprep.subr.mxu0 0.0
        %762 = vmatpush1.msra.mxu0 0.0
        %763 = vmatprep.subr.mxu0 0.0
        %764 = vmatpush1.msra.mxu0 0.0
        %765 = vmatprep.subr.mxu0 0.0
        %766 = vmatpush1.msra.mxu0 0.0
        %767 = vmatprep.subr.mxu0 0.0
        %768 = vmatpush1.msra.mxu0 0.0
        %769 = vmatprep.subr.mxu0 0.0
        %770 = vmatpush1.msra.mxu0 0.0
        %771 = vmatprep.subr.mxu0 0.0
        %772 = vmatpush1.msra.mxu0 0.0
        %773 = vmatprep.subr.mxu0 0.0
        %774 = vmatpush1.msra.mxu0 0.0
        %775 = vmatprep.subr.mxu0 0.0
        %776 = vmatpush1.msra.mxu0 0.0
        %777 = vmatprep.subr.mxu0 0.0
        %778 = vmatpush1.msra.mxu0 0.0
        %779 = vmatprep.subr.mxu0 0.0
        %780 = vmatpush1.msra.mxu0 0.0
        %781 = vmatprep.subr.mxu0 0.0
        %782 = vmatpush1.msra.mxu0 0.0
        %783 = vmatprep.subr.mxu0 0.0
        %784 = vmatpush1.msra.mxu0 0.0
        %785 = vmatprep.subr.mxu0 0.0
        %786 = vmatpush1.msra.mxu0 0.0
        %787 = vmatprep.subr.mxu0 0.0
        %788 = vmatpush1.msra.mxu0 0.0
        %789 = vmatprep.subr.mxu0 0.0
        %790 = vmatpush1.msra.mxu0 0.0
        %791 = vmatprep.subr.mxu0 0.0
        %792 = vmatpush1.msra.mxu0 0.0
        %793 = vmatprep.subr.mxu0 0.0
        %794 = vmatpush1.msra.mxu0 0.0
        %795 = vmatprep.subr.mxu0 0.0
        %796 = vmatpush1.msra.mxu0 0.0
        %797 = vmatprep.subr.mxu0 0.0
        %798 = vmatpush1.msra.mxu0 0.0
        %799 = vmatprep.subr.mxu0 0.0
        %800 = vmatpush1.msra.mxu0 0.0
        %801 = vmatprep.subr.mxu0 0.0
        %802 = vmatpush1.msra.mxu0 0.0
        %803 = vmatprep.subr.mxu0 0.0
        %804 = vmatpush1.msra.mxu0 0.0
        %805 = vmatprep.subr.mxu0 0.0
        %806 = vmatpush1.msra.mxu0 0.0
        %807 = vmatprep.subr.mxu0 0.0
        %808 = vmatpush1.msra.mxu0 0.0
        %809 = vmatprep.subr.mxu0 0.0
        %810 = vmatpush1.msra.mxu0 0.0
        %811 = vmatprep.subr.mxu0 0.0
        %812 = vmatpush1.msra.mxu0 0.0
        %813 = vmatprep.subr.mxu0 0.0
        %814 = vmatpush1.msra.mxu0 0.0
        %815 = vmatprep.subr.mxu0 0.0
        %816 = vmatpush1.msra.mxu0 0.0
        %817 = vmatprep.mubr.f32.mxu0 0.0
        %818 = vmatmul.mubr.f32.gmra.mrb[0].mxu0 %v742
        %v819 = vpop.f32.mrb[0].mxu0
        %v820 = vadd.f32 0.0, %v819
        %v821 = vpop.f32.mrb[0].mxu0
        %822 = vmatprep.mubr.f32.mxu0 0.0
        %823 = vmatmul.mubr.f32.gmra.mrb[0].mxu0 %v745
        %v824 = vpop.f32.mrb[0].mxu0
        %v825 = vadd.f32 0.0, %v824
        %v826 = vpop.f32.mrb[0].mxu0
        %827 = vmatprep.mubr.f32.mxu0 0.0
        %828 = vmatmul.mubr.f32.gmra.mrb[0].mxu0 %v748
        %v829 = vpop.f32.mrb[0].mxu0
        %v830 = vadd.f32 0.0, %v829
        %v831 = vpop.f32.mrb[0].mxu0
        %832 = vmatprep.mubr.f32.mxu0 0.0
        %833 = vmatmul.mubr.f32.gmra.mrb[0].mxu0 %v751
        %v834 = vpop.f32.mrb[0].mxu0
        %v835 = vadd.f32 0.0, %v834
        %v836 = vpop.f32.mrb[0].mxu0
        %837 = vdwg.mxu0
        %v838 = vld [vmem:[%s7] sm:$0xff]
        %v839 = vld [vmem:[%s7 + $0x8] sm:$0xff]
        %v840 = vld [vmem:[%s8] sm:$0xff]
        %v841 = vld [vmem:[%s8 + $0x8] sm:$0xff]
        %v842 = vmul.f32 %v820, %v838
        %v843 = vmul.f32 %v825, %v839
        %v844 = vmul.f32 %v830, %v840
        %v845 = vmul.f32 %v835, %v841
        %v846 = vsub.f32 %v842, %v844
        %v847 = vsub.f32 %v843, %v845
        %v848 = vmul.f32 %v820, %v840
        %v849 = vmul.f32 %v825, %v841
        %v850 = vmul.f32 %v830, %v838
        %v851 = vmul.f32 %v835, %v839
        %v852 = vadd.f32 %v848, %v850
        %v853 = vadd.f32 %v849, %v851
        %v855 = vsel %vm700, %v696, 0
        %v858 = vsel %vm700, %v697, 0
        %860 = vmatprep.subr.mxu0 0.0
        %861 = vmatpush1.msra.mxu0 %v846
        %862 = vmatprep.subr.mxu0 0.0
        %863 = vmatpush1.msra.mxu0 %v847
        %864 = vmatprep.subr.mxu0 0.0
        %865 = vmatpush1.msra.mxu0 %v852
        %866 = vmatprep.subr.mxu0 0.0
        %867 = vmatpush1.msra.mxu0 %v853
        %868 = vmatprep.subr.mxu0 0.0
        %869 = vmatpush1.msra.mxu0 0.0
        %870 = vmatprep.subr.mxu0 0.0
        %871 = vmatpush1.msra.mxu0 0.0
        %872 = vmatprep.subr.mxu0 0.0
        %873 = vmatpush1.msra.mxu0 0.0
        %874 = vmatprep.subr.mxu0 0.0
        %875 = vmatpush1.msra.mxu0 0.0
        %876 = vmatprep.subr.mxu0 0.0
        %877 = vmatpush1.msra.mxu0 0.0
        %878 = vmatprep.subr.mxu0 0.0
        %879 = vmatpush1.msra.mxu0 0.0
        %880 = vmatprep.subr.mxu0 0.0
        %881 = vmatpush1.msra.mxu0 0.0
        %882 = vmatprep.subr.mxu0 0.0
        %883 = vmatpush1.msra.mxu0 0.0
        %884 = vmatprep.subr.mxu0 0.0
        %885 = vmatpush1.msra.mxu0 0.0
        %886 = vmatprep.subr.mxu0 0.0
        %887 = vmatpush1.msra.mxu0 0.0
        %888 = vmatprep.subr.mxu0 0.0
        %889 = vmatpush1.msra.mxu0 0.0
        %890 = vmatprep.subr.mxu0 0.0
        %891 = vmatpush1.msra.mxu0 0.0
        %892 = vmatprep.subr.mxu0 0.0
        %893 = vmatpush1.msra.mxu0 0.0
        %894 = vmatprep.subr.mxu0 0.0
        %895 = vmatpush1.msra.mxu0 0.0
        %896 = vmatprep.subr.mxu0 0.0
        %897 = vmatpush1.msra.mxu0 0.0
        %898 = vmatprep.subr.mxu0 0.0
        %899 = vmatpush1.msra.mxu0 0.0
        %900 = vmatprep.subr.mxu0 0.0
        %901 = vmatpush1.msra.mxu0 0.0
        %902 = vmatprep.subr.mxu0 0.0
        %903 = vmatpush1.msra.mxu0 0.0
        %904 = vmatprep.subr.mxu0 0.0
        %905 = vmatpush1.msra.mxu0 0.0
        %906 = vmatprep.subr.mxu0 0.0
        %907 = vmatpush1.msra.mxu0 0.0
        %908 = vmatprep.subr.mxu0 0.0
        %909 = vmatpush1.msra.mxu0 0.0
        %910 = vmatprep.subr.mxu0 0.0
        %911 = vmatpush1.msra.mxu0 0.0
        %912 = vmatprep.subr.mxu0 0.0
        %913 = vmatpush1.msra.mxu0 0.0
        %914 = vmatprep.subr.mxu0 0.0
        %915 = vmatpush1.msra.mxu0 0.0
        %916 = vmatprep.subr.mxu0 0.0
        %917 = vmatpush1.msra.mxu0 0.0
        %918 = vmatprep.subr.mxu0 0.0
        %919 = vmatpush1.msra.mxu0 0.0
        %920 = vmatprep.subr.mxu0 0.0
        %921 = vmatpush1.msra.mxu0 0.0
        %922 = vmatprep.subr.mxu0 0.0
        %923 = vmatpush1.msra.mxu0 0.0
        %924 = vmatprep.mubr.f32.mxu0 0.0
        %925 = vmatmul.mubr.f32.gmra.mrb[0].mxu0 %v855
        %v926 = vpop.f32.mrb[0].mxu0
        %v927 = vadd.f32 0.0, %v926
        %v928 = vpop.f32.mrb[0].mxu0
        %929 = vmatprep.mubr.f32.mxu0 0.0
        %930 = vmatmul.mubr.f32.gmra.mrb[0].mxu0 %v858
        %v931 = vpop.f32.mrb[0].mxu0
        %v932 = vadd.f32 0.0, %v931
        %v933 = vpop.f32.mrb[0].mxu0
        %934 = vdwg.mxu0
        %v935 = vld [vmem:[%s9] sm:$0x1]
        %v936 = vld [vmem:[%s10] sm:$0x1]
        %v937 = vsel %vm700, %v927, 0.0
        %938 = vadd.xlane.f32.xlu0 %v937
        %v939 = vpop.xlane.xlu0 %938
        %v940 = vsel %vm700, %v932, 0.0
        %941 = vadd.xlane.f32.xlu0 %v940
        %v942 = vpop.xlane.xlu0 %941
        %v943 = vmul.f32 %v939, %v707
        %v944 = vmul.f32 %v942, %v707
        %v945 = vsub.f32 %v927, %v943
        %v946 = vsub.f32 %v932, %v944
        %v947 = vmul.f32 %v945, %v945
        %v948 = vmul.f32 %v946, %v946
        %v949 = vsel %vm700, %v947, 0.0
        %950 = vadd.xlane.f32.xlu0 %v949
        %v951 = vpop.xlane.xlu0 %950
        %v952 = vsel %vm700, %v948, 0.0
        %953 = vadd.xlane.f32.xlu0 %v952
        %v954 = vpop.xlane.xlu0 %953
        %v955 = vmul.f32 %v951, %v707
        %v956 = vmul.f32 %v954, %v707
        %v957 = vadd.f32 %v955, 1e-06
        %v958 = vadd.f32 %v956, 1e-06
        %v959 = vrsqrt.pop %v957
        %v960 = vrsqrt.pop %v958
        %v961 = vmul.f32 %v945, %v959
        %v962 = vmul.f32 %v946, %v960
        %v963 = vlaneseq
        %v964 = vshrl.u32 %v963, 7
        %v965 = vsub.s32 0, %v964
        %v966 = vrot.slane %v935, %v965
        %v967 = vmul.f32 %v961, %v966
        %v968 = vmul.f32 %v962, %v966
        %v969 = vlaneseq
        %v970 = vshrl.u32 %v969, 7
        %v971 = vsub.s32 0, %v970
        %v972 = vrot.slane %v936, %v971
        %v973 = vadd.f32 %v967, %v972
        %v974 = vadd.f32 %v968, %v972
        %v975 = vld [vmem:[%s11] sm:$0xff]
        %v976 = vld [vmem:[%s11 + $0x8] sm:$0xff]
        %v977 = vld [vmem:[%s11 + $0x10] sm:$0xff]
        %v978 = vld [vmem:[%s11 + $0x18] sm:$0xff]
        %v979 = vld [vmem:[%s12] sm:$0x1]
        %v980 = vlaneseq
        %v981 = vshrl.u32 %v980, 7
        %v982 = vsub.s32 0, %v981
        %v983 = vrot.slane %v979, %v982
        %v985 = vsel %vm700, %v973, 0
        %v988 = vsel %vm700, %v974, 0
        %990 = vmatprep.subr.mxu0 0.0
        %991 = vmatpush1.msra.mxu0 %v975
        %992 = vmatprep.subr.mxu0 0.0
        %993 = vmatpush1.msra.mxu0 %v976
        %994 = vmatprep.subr.mxu0 0.0
        %995 = vmatpush1.msra.mxu0 %v977
        %996 = vmatprep.subr.mxu0 0.0
        %997 = vmatpush1.msra.mxu0 %v978
        %998 = vmatprep.subr.mxu0 0.0
        %999 = vmatpush1.msra.mxu0 0.0
        %1000 = vmatprep.subr.mxu0 0.0
        %1001 = vmatpush1.msra.mxu0 0.0
        %1002 = vmatprep.subr.mxu0 0.0
        %1003 = vmatpush1.msra.mxu0 0.0
        %1004 = vmatprep.subr.mxu0 0.0
        %1005 = vmatpush1.msra.mxu0 0.0
        %1006 = vmatprep.subr.mxu0 0.0
        %1007 = vmatpush1.msra.mxu0 0.0
        %1008 = vmatprep.subr.mxu0 0.0
        %1009 = vmatpush1.msra.mxu0 0.0
        %1010 = vmatprep.subr.mxu0 0.0
        %1011 = vmatpush1.msra.mxu0 0.0
        %1012 = vmatprep.subr.mxu0 0.0
        %1013 = vmatpush1.msra.mxu0 0.0
        %1014 = vmatprep.subr.mxu0 0.0
        %1015 = vmatpush1.msra.mxu0 0.0
        %1016 = vmatprep.subr.mxu0 0.0
        %1017 = vmatpush1.msra.mxu0 0.0
        %1018 = vmatprep.subr.mxu0 0.0
        %1019 = vmatpush1.msra.mxu0 0.0
        %1020 = vmatprep.subr.mxu0 0.0
        %1021 = vmatpush1.msra.mxu0 0.0
        %1022 = vmatprep.subr.mxu0 0.0
        %1023 = vmatpush1.msra.mxu0 0.0
        %1024 = vmatprep.subr.mxu0 0.0
        %1025 = vmatpush1.msra.mxu0 0.0
        %1026 = vmatprep.subr.mxu0 0.0
        %1027 = vmatpush1.msra.mxu0 0.0
        %1028 = vmatprep.subr.mxu0 0.0
        %1029 = vmatpush1.msra.mxu0 0.0
        %1030 = vmatprep.subr.mxu0 0.0
        %1031 = vmatpush1.msra.mxu0 0.0
        %1032 = vmatprep.subr.mxu0 0.0
        %1033 = vmatpush1.msra.mxu0 0.0
        %1034 = vmatprep.subr.mxu0 0.0
        %1035 = vmatpush1.msra.mxu0 0.0
        %1036 = vmatprep.subr.mxu0 0.0
        %1037 = vmatpush1.msra.mxu0 0.0
        %1038 = vmatprep.subr.mxu0 0.0
        %1039 = vmatpush1.msra.mxu0 0.0
        %1040 = vmatprep.subr.mxu0 0.0
        %1041 = vmatpush1.msra.mxu0 0.0
        %1042 = vmatprep.subr.mxu0 0.0
        %1043 = vmatpush1.msra.mxu0 0.0
        %1044 = vmatprep.subr.mxu0 0.0
        %1045 = vmatpush1.msra.mxu0 0.0
        %1046 = vmatprep.subr.mxu0 0.0
        %1047 = vmatpush1.msra.mxu0 0.0
        %1048 = vmatprep.subr.mxu0 0.0
        %1049 = vmatpush1.msra.mxu0 0.0
        %1050 = vmatprep.subr.mxu0 0.0
        %1051 = vmatpush1.msra.mxu0 0.0
        %1052 = vmatprep.subr.mxu0 0.0
        %1053 = vmatpush1.msra.mxu0 0.0
        %1054 = vmatprep.mubr.f32.mxu0 0.0
        %1055 = vmatmul.mubr.f32.gmra.mrb[0].mxu0 %v985
        %v1056 = vpop.f32.mrb[0].mxu0
        %v1057 = vadd.f32 %v983, %v1056
        %v1058 = vpop.f32.mrb[0].mxu0
        %1059 = vmatprep.mubr.f32.mxu0 0.0
        %1060 = vmatmul.mubr.f32.gmra.mrb[0].mxu0 %v988
        %v1061 = vpop.f32.mrb[0].mxu0
        %v1062 = vadd.f32 %v983, %v1061
        %v1063 = vpop.f32.mrb[0].mxu0
        %1064 = vdwg.mxu0
        %v1065 = vmul.f32 %v1057, 0.5
        %v1066 = vmul.f32 %v1062, 0.5
        %v1067 = vmul.f32 %v1057, 0.70710677
        %v1068 = vmul.f32 %v1062, 0.70710677
        %v1069 = verf.f32.pop %v1067
        %v1070 = verf.f32.pop %v1068
        %v1071 = vadd.f32 %v1069, 1.0
        %v1072 = vadd.f32 %v1070, 1.0
        %v1073 = vmul.f32 %v1065, %v1071
        %v1074 = vmul.f32 %v1066, %v1072
        %v1075 = vld [vmem:[%s13] sm:$0xff]
        %v1076 = vld [vmem:[%s13 + $0x8] sm:$0xff]
        %v1077 = vld [vmem:[%s13 + $0x10] sm:$0xff]
        %v1078 = vld [vmem:[%s13 + $0x18] sm:$0xff]
        %v1079 = vld [vmem:[%s13 + $0x20] sm:$0xff]
        %v1080 = vld [vmem:[%s13 + $0x28] sm:$0xff]
        %v1081 = vld [vmem:[%s13 + $0x30] sm:$0xff]
        %v1082 = vld [vmem:[%s13 + $0x38] sm:$0xff]
        %v1083 = vld [vmem:[%s13 + $0x40] sm:$0xff]
        %v1084 = vld [vmem:[%s13 + $0x48] sm:$0xff]
        %v1085 = vld [vmem:[%s13 + $0x50] sm:$0xff]
        %v1086 = vld [vmem:[%s13 + $0x58] sm:$0xff]
        %v1087 = vld [vmem:[%s13 + $0x60] sm:$0xff]
        %v1088 = vld [vmem:[%s13 + $0x68] sm:$0xff]
        %v1089 = vld [vmem:[%s13 + $0x70] sm:$0xff]
        %v1090 = vld [vmem:[%s13 + $0x78] sm:$0xff]
        %v1091 = vld [vmem:[%s14] sm:$0x1]
        %v1092 = vlaneseq
        %v1093 = vshrl.u32 %v1092, 7
        %v1094 = vsub.s32 0, %v1093
        %v1095 = vrot.slane %v1091, %v1094
        %1096 = vmatprep.subr.mxu0 0.0
        %1097 = vmatpush1.msra.mxu0 %v1075
        %1098 = vmatprep.subr.mxu0 0.0
        %1099 = vmatpush1.msra.mxu0 %v1076
        %1100 = vmatprep.subr.mxu0 0.0
        %1101 = vmatpush1.msra.mxu0 %v1077
        %1102 = vmatprep.subr.mxu0 0.0
        %1103 = vmatpush1.msra.mxu0 %v1078
        %1104 = vmatprep.subr.mxu0 0.0
        %1105 = vmatpush1.msra.mxu0 %v1079
        %1106 = vmatprep.subr.mxu0 0.0
        %1107 = vmatpush1.msra.mxu0 %v1080
        %1108 = vmatprep.subr.mxu0 0.0
        %1109 = vmatpush1.msra.mxu0 %v1081
        %1110 = vmatprep.subr.mxu0 0.0
        %1111 = vmatpush1.msra.mxu0 %v1082
        %1112 = vmatprep.subr.mxu0 0.0
        %1113 = vmatpush1.msra.mxu0 %v1083
        %1114 = vmatprep.subr.mxu0 0.0
        %1115 = vmatpush1.msra.mxu0 %v1084
        %1116 = vmatprep.subr.mxu0 0.0
        %1117 = vmatpush1.msra.mxu0 %v1085
        %1118 = vmatprep.subr.mxu0 0.0
        %1119 = vmatpush1.msra.mxu0 %v1086
        %1120 = vmatprep.subr.mxu0 0.0
        %1121 = vmatpush1.msra.mxu0 %v1087
        %1122 = vmatprep.subr.mxu0 0.0
        %1123 = vmatpush1.msra.mxu0 %v1088
        %1124 = vmatprep.subr.mxu0 0.0
        %1125 = vmatpush1.msra.mxu0 %v1089
        %1126 = vmatprep.subr.mxu0 0.0
        %1127 = vmatpush1.msra.mxu0 %v1090
        %1128 = vmatprep.subr.mxu0 0.0
        %1129 = vmatpush1.msra.mxu0 0.0
        %1130 = vmatprep.subr.mxu0 0.0
        %1131 = vmatpush1.msra.mxu0 0.0
        %1132 = vmatprep.subr.mxu0 0.0
        %1133 = vmatpush1.msra.mxu0 0.0
        %1134 = vmatprep.subr.mxu0 0.0
        %1135 = vmatpush1.msra.mxu0 0.0
        %1136 = vmatprep.subr.mxu0 0.0
        %1137 = vmatpush1.msra.mxu0 0.0
        %1138 = vmatprep.subr.mxu0 0.0
        %1139 = vmatpush1.msra.mxu0 0.0
        %1140 = vmatprep.subr.mxu0 0.0
        %1141 = vmatpush1.msra.mxu0 0.0
        %1142 = vmatprep.subr.mxu0 0.0
        %1143 = vmatpush1.msra.mxu0 0.0
        %1144 = vmatprep.subr.mxu0 0.0
        %1145 = vmatpush1.msra.mxu0 0.0
        %1146 = vmatprep.subr.mxu0 0.0
        %1147 = vmatpush1.msra.mxu0 0.0
        %1148 = vmatprep.subr.mxu0 0.0
        %1149 = vmatpush1.msra.mxu0 0.0
        %1150 = vmatprep.subr.mxu0 0.0
        %1151 = vmatpush1.msra.mxu0 0.0
        %1152 = vmatprep.subr.mxu0 0.0
        %1153 = vmatpush1.msra.mxu0 0.0
        %1154 = vmatprep.subr.mxu0 0.0
        %1155 = vmatpush1.msra.mxu0 0.0
        %1156 = vmatprep.subr.mxu0 0.0
        %1157 = vmatpush1.msra.mxu0 0.0
        %1158 = vmatprep.subr.mxu0 0.0
        %1159 = vmatpush1.msra.mxu0 0.0
        %1160 = vmatprep.mubr.f32.mxu0 0.0
        %1161 = vmatmul.mubr.f32.gmra.mrb[0].mxu0 %v1073
        %v1162 = vpop.f32.mrb[0].mxu0
        %v1163 = vadd.f32 %v1095, %v1162
        %v1164 = vpop.f32.mrb[0].mxu0
        %1165 = vmatprep.mubr.f32.mxu0 0.0
        %1166 = vmatmul.mubr.f32.gmra.mrb[0].mxu0 %v1074
        %v1167 = vpop.f32.mrb[0].mxu0
        %v1168 = vadd.f32 %v1095, %v1167
        %v1169 = vpop.f32.mrb[0].mxu0
        %1170 = vdwg.mxu0
        %v1171 = vadd.f32 %v684, %v1163
        %v1172 = vadd.f32 %v689, %v1168
        %v1173 = vld [vmem:[%s5 + $0x1] sm:$0x1]
        %v1174 = vld [vmem:[%s6 + $0x1] sm:$0x1]
        %v1175 = vsel %vm700, %v1171, 0.0
        %1176 = vadd.xlane.f32.xlu0 %v1175
        %v1177 = vpop.xlane.xlu0 %1176
        %v1178 = vsel %vm700, %v1172, 0.0
        %1179 = vadd.xlane.f32.xlu0 %v1178
        %v1180 = vpop.xlane.xlu0 %1179
        %v1181 = vmul.f32 %v1177, %v707
        %v1182 = vmul.f32 %v1180, %v707
        %v1183 = vsub.f32 %v1171, %v1181
        %v1184 = vsub.f32 %v1172, %v1182
        %v1185 = vmul.f32 %v1183, %v1183
        %v1186 = vmul.f32 %v1184, %v1184
        %v1187 = vsel %vm700, %v1185, 0.0
        %1188 = vadd.xlane.f32.xlu0 %v1187
        %v1189 = vpop.xlane.xlu0 %1188
        %v1190 = vsel %vm700, %v1186, 0.0
        %1191 = vadd.xlane.f32.xlu0 %v1190
        %v1192 = vpop.xlane.xlu0 %1191
        %v1193 = vmul.f32 %v1189, %v707
        %v1194 = vmul.f32 %v1192, %v707
        %v1195 = vadd.f32 %v1193, 1e-06
        %v1196 = vadd.f32 %v1194, 1e-06
        %v1197 = vrsqrt.pop %v1195
        %v1198 = vrsqrt.pop %v1196
        %v1199 = vmul.f32 %v1183, %v1197
        %v1200 = vmul.f32 %v1184, %v1198
        %v1201 = vlaneseq
        %v1202 = vshrl.u32 %v1201, 7
        %v1203 = vsub.s32 0, %v1202
        %v1204 = vrot.slane %v1173, %v1203
        %v1205 = vmul.f32 %v1199, %v1204
        %v1206 = vmul.f32 %v1200, %v1204
        %v1207 = vlaneseq
        %v1208 = vshrl.u32 %v1207, 7
        %v1209 = vsub.s32 0, %v1208
        %v1210 = vrot.slane %v1174, %v1209
        %v1211 = vadd.f32 %v1205, %v1210
        %v1212 = vadd.f32 %v1206, %v1210
        %1213 = vmatprep.subr.mxu0 0.0
        %1214 = vmatpush1.msra.mxu0 %v1211
        %1215 = vmatprep.subr.mxu0 0.0
        %1216 = vmatpush1.msra.mxu0 %v1212
        %1217 = vmatprep.subr.mxu0 0.0
        %1218 = vmatpush1.msra.mxu0 0.0
        %1219 = vmatprep.subr.mxu0 0.0
        %1220 = vmatpush1.msra.mxu0 0.0
        %1221 = vmatprep.subr.mxu0 0.0
        %1222 = vmatpush1.msra.mxu0 0.0
        %1223 = vmatprep.subr.mxu0 0.0
        %1224 = vmatpush1.msra.mxu0 0.0
        %1225 = vmatprep.subr.mxu0 0.0
        %1226 = vmatpush1.msra.mxu0 0.0
        %1227 = vmatprep.subr.mxu0 0.0
        %1228 = vmatpush1.msra.mxu0 0.0
        %1229 = vmatprep.subr.mxu0 0.0
        %1230 = vmatpush1.msra.mxu0 0.0
        %1231 = vmatprep.subr.mxu0 0.0
        %1232 = vmatpush1.msra.mxu0 0.0
        %1233 = vmatprep.subr.mxu0 0.0
        %1234 = vmatpush1.msra.mxu0 0.0
        %1235 = vmatprep.subr.mxu0 0.0
        %1236 = vmatpush1.msra.mxu0 0.0
        %1237 = vmatprep.subr.mxu0 0.0
        %1238 = vmatpush1.msra.mxu0 0.0
        %1239 = vmatprep.subr.mxu0 0.0
        %1240 = vmatpush1.msra.mxu0 0.0
        %1241 = vmatprep.subr.mxu0 0.0
        %1242 = vmatpush1.msra.mxu0 0.0
        %1243 = vmatprep.subr.mxu0 0.0
        %1244 = vmatpush1.msra.mxu0 0.0
        %1245 = vmatprep.subr.mxu0 0.0
        %1246 = vmatpush1.msra.mxu0 0.0
        %1247 = vmatprep.subr.mxu0 0.0
        %1248 = vmatpush1.msra.mxu0 0.0
        %1249 = vmatprep.subr.mxu0 0.0
        %1250 = vmatpush1.msra.mxu0 0.0
        %1251 = vmatprep.subr.mxu0 0.0
        %1252 = vmatpush1.msra.mxu0 0.0
        %1253 = vmatprep.subr.mxu0 0.0
        %1254 = vmatpush1.msra.mxu0 0.0
        %1255 = vmatprep.subr.mxu0 0.0
        %1256 = vmatpush1.msra.mxu0 0.0
        %1257 = vmatprep.subr.mxu0 0.0
        %1258 = vmatpush1.msra.mxu0 0.0
        %1259 = vmatprep.subr.mxu0 0.0
        %1260 = vmatpush1.msra.mxu0 0.0
        %1261 = vmatprep.subr.mxu0 0.0
        %1262 = vmatpush1.msra.mxu0 0.0
        %1263 = vmatprep.subr.mxu0 0.0
        %1264 = vmatpush1.msra.mxu0 0.0
        %1265 = vmatprep.subr.mxu0 0.0
        %1266 = vmatpush1.msra.mxu0 0.0
        %1267 = vmatprep.subr.mxu0 0.0
        %1268 = vmatpush1.msra.mxu0 0.0
        %1269 = vmatprep.subr.mxu0 0.0
        %1270 = vmatpush1.msra.mxu0 0.0
        %1271 = vmatprep.subr.mxu0 0.0
        %1272 = vmatpush1.msra.mxu0 0.0
        %1273 = vmatprep.subr.mxu0 0.0
        %1274 = vmatpush1.msra.mxu0 0.0
        %1275 = vmatprep.subr.mxu0 0.0
        %1276 = vmatpush1.msra.mxu0 0.0
        %1277 = vmatprep.mubr.f32.mxu0 0.0
        %1278 = vmatmul.mubr.f32.gmra.mrb[0].mxu0 %v742
        %v1279 = vpop.f32.mrb[0].mxu0
        %v1280 = vadd.f32 0.0, %v1279
        %v1281 = vpop.f32.mrb[0].mxu0
        %1282 = vmatprep.mubr.f32.mxu0 0.0
        %1283 = vmatmul.mubr.f32.gmra.mrb[0].mxu0 %v745
        %v1284 = vpop.f32.mrb[0].mxu0
        %v1285 = vadd.f32 0.0, %v1284
        %v1286 = vpop.f32.mrb[0].mxu0
        %1287 = vmatprep.mubr.f32.mxu0 0.0
        %1288 = vmatmul.mubr.f32.gmra.mrb[0].mxu0 %v748
        %v1289 = vpop.f32.mrb[0].mxu0
        %v1290 = vadd.f32 0.0, %v1289
        %v1291 = vpop.f32.mrb[0].mxu0
        %1292 = vmatprep.mubr.f32.mxu0 0.0
        %1293 = vmatmul.mubr.f32.gmra.mrb[0].mxu0 %v751
        %v1294 = vpop.f32.mrb[0].mxu0
        %v1295 = vadd.f32 0.0, %v1294
        %v1296 = vpop.f32.mrb[0].mxu0
        %1297 = vdwg.mxu0
        %s1298 = scalar_lea.vmem %s7, 16
        %v1299 = vld [vmem:[%s1298] sm:$0xff]
        %v1300 = vld [vmem:[%s1298 + $0x8] sm:$0xff]
        %s1301 = scalar_lea.vmem %s8, 16
        %v1302 = vld [vmem:[%s1301] sm:$0xff]
        %v1303 = vld [vmem:[%s1301 + $0x8] sm:$0xff]
        %v1304 = vmul.f32 %v1280, %v1299
        %v1305 = vmul.f32 %v1285, %v1300
        %v1306 = vmul.f32 %v1290, %v1302
        %v1307 = vmul.f32 %v1295, %v1303
        %v1308 = vsub.f32 %v1304, %v1306
        %v1309 = vsub.f32 %v1305, %v1307
        %v1310 = vmul.f32 %v1280, %v1302
        %v1311 = vmul.f32 %v1285, %v1303
        %v1312 = vmul.f32 %v1290, %v1299
        %v1313 = vmul.f32 %v1295, %v1300
        %v1314 = vadd.f32 %v1310, %v1312
        %v1315 = vadd.f32 %v1311, %v1313
        %1316 = vmatprep.subr.mxu0 0.0
        %1317 = vmatpush1.msra.mxu0 %v1308
        %1318 = vmatprep.subr.mxu0 0.0
        %1319 = vmatpush1.msra.mxu0 %v1309
        %1320 = vmatprep.subr.mxu0 0.0
        %1321 = vmatpush1.msra.mxu0 %v1314
        %1322 = vmatprep.subr.mxu0 0.0
        %1323 = vmatpush1.msra.mxu0 %v1315
        %1324 = vmatprep.subr.mxu0 0.0
        %1325 = vmatpush1.msra.mxu0 0.0
        %1326 = vmatprep.subr.mxu0 0.0
        %1327 = vmatpush1.msra.mxu0 0.0
        %1328 = vmatprep.subr.mxu0 0.0
        %1329 = vmatpush1.msra.mxu0 0.0
        %1330 = vmatprep.subr.mxu0 0.0
        %1331 = vmatpush1.msra.mxu0 0.0
        %1332 = vmatprep.subr.mxu0 0.0
        %1333 = vmatpush1.msra.mxu0 0.0
        %1334 = vmatprep.subr.mxu0 0.0
        %1335 = vmatpush1.msra.mxu0 0.0
        %1336 = vmatprep.subr.mxu0 0.0
        %1337 = vmatpush1.msra.mxu0 0.0
        %1338 = vmatprep.subr.mxu0 0.0
        %1339 = vmatpush1.msra.mxu0 0.0
        %1340 = vmatprep.subr.mxu0 0.0
        %1341 = vmatpush1.msra.mxu0 0.0
        %1342 = vmatprep.subr.mxu0 0.0
        %1343 = vmatpush1.msra.mxu0 0.0
        %1344 = vmatprep.subr.mxu0 0.0
        %1345 = vmatpush1.msra.mxu0 0.0
        %1346 = vmatprep.subr.mxu0 0.0
        %1347 = vmatpush1.msra.mxu0 0.0
        %1348 = vmatprep.subr.mxu0 0.0
        %1349 = vmatpush1.msra.mxu0 0.0
        %1350 = vmatprep.subr.mxu0 0.0
        %1351 = vmatpush1.msra.mxu0 0.0
        %1352 = vmatprep.subr.mxu0 0.0
        %1353 = vmatpush1.msra.mxu0 0.0
        %1354 = vmatprep.subr.mxu0 0.0
        %1355 = vmatpush1.msra.mxu0 0.0
        %1356 = vmatprep.subr.mxu0 0.0
        %1357 = vmatpush1.msra.mxu0 0.0
        %1358 = vmatprep.subr.mxu0 0.0
        %1359 = vmatpush1.msra.mxu0 0.0
        %1360 = vmatprep.subr.mxu0 0.0
        %1361 = vmatpush1.msra.mxu0 0.0
        %1362 = vmatprep.subr.mxu0 0.0
        %1363 = vmatpush1.msra.mxu0 0.0
        %1364 = vmatprep.subr.mxu0 0.0
        %1365 = vmatpush1.msra.mxu0 0.0
        %1366 = vmatprep.subr.mxu0 0.0
        %1367 = vmatpush1.msra.mxu0 0.0
        %1368 = vmatprep.subr.mxu0 0.0
        %1369 = vmatpush1.msra.mxu0 0.0
        %1370 = vmatprep.subr.mxu0 0.0
        %1371 = vmatpush1.msra.mxu0 0.0
        %1372 = vmatprep.subr.mxu0 0.0
        %1373 = vmatpush1.msra.mxu0 0.0
        %1374 = vmatprep.subr.mxu0 0.0
        %1375 = vmatpush1.msra.mxu0 0.0
        %1376 = vmatprep.subr.mxu0 0.0
        %1377 = vmatpush1.msra.mxu0 0.0
        %1378 = vmatprep.subr.mxu0 0.0
        %1379 = vmatpush1.msra.mxu0 0.0
        %1380 = vmatprep.mubr.f32.mxu0 0.0
        %1381 = vmatmul.mubr.f32.gmra.mrb[0].mxu0 %v855
        %v1382 = vpop.f32.mrb[0].mxu0
        %v1383 = vadd.f32 0.0, %v1382
        %v1384 = vpop.f32.mrb[0].mxu0
        %1385 = vmatprep.mubr.f32.mxu0 0.0
        %1386 = vmatmul.mubr.f32.gmra.mrb[0].mxu0 %v858
        %v1387 = vpop.f32.mrb[0].mxu0
        %v1388 = vadd.f32 0.0, %v1387
        %v1389 = vpop.f32.mrb[0].mxu0
        %1390 = vdwg.mxu0
        %v1391 = vld [vmem:[%s9 + $0x1] sm:$0x1]
        %v1392 = vld [vmem:[%s10 + $0x1] sm:$0x1]
        %v1393 = vsel %vm700, %v1383, 0.0
        %1394 = vadd.xlane.f32.xlu0 %v1393
        %v1395 = vpop.xlane.xlu0 %1394
        %v1396 = vsel %vm700, %v1388, 0.0
        %1397 = vadd.xlane.f32.xlu0 %v1396
        %v1398 = vpop.xlane.xlu0 %1397
        %v1399 = vmul.f32 %v1395, %v707
        %v1400 = vmul.f32 %v1398, %v707
        %v1401 = vsub.f32 %v1383, %v1399
        %v1402 = vsub.f32 %v1388, %v1400
        %v1403 = vmul.f32 %v1401, %v1401
        %v1404 = vmul.f32 %v1402, %v1402
        %v1405 = vsel %vm700, %v1403, 0.0
        %1406 = vadd.xlane.f32.xlu0 %v1405
        %v1407 = vpop.xlane.xlu0 %1406
        %v1408 = vsel %vm700, %v1404, 0.0
        %1409 = vadd.xlane.f32.xlu0 %v1408
        %v1410 = vpop.xlane.xlu0 %1409
        %v1411 = vmul.f32 %v1407, %v707
        %v1412 = vmul.f32 %v1410, %v707
        %v1413 = vadd.f32 %v1411, 1e-06
        %v1414 = vadd.f32 %v1412, 1e-06
        %v1415 = vrsqrt.pop %v1413
        %v1416 = vrsqrt.pop %v1414
        %v1417 = vmul.f32 %v1401, %v1415
        %v1418 = vmul.f32 %v1402, %v1416
        %v1419 = vlaneseq
        %v1420 = vshrl.u32 %v1419, 7
        %v1421 = vsub.s32 0, %v1420
        %v1422 = vrot.slane %v1391, %v1421
        %v1423 = vmul.f32 %v1417, %v1422
        %v1424 = vmul.f32 %v1418, %v1422
        %v1425 = vlaneseq
        %v1426 = vshrl.u32 %v1425, 7
        %v1427 = vsub.s32 0, %v1426
        %v1428 = vrot.slane %v1392, %v1427
        %v1429 = vadd.f32 %v1423, %v1428
        %v1430 = vadd.f32 %v1424, %v1428
        %s1431 = scalar_lea.vmem %s11, 32
        %v1432 = vld [vmem:[%s1431] sm:$0xff]
        %v1433 = vld [vmem:[%s1431 + $0x8] sm:$0xff]
        %v1434 = vld [vmem:[%s1431 + $0x10] sm:$0xff]
        %v1435 = vld [vmem:[%s1431 + $0x18] sm:$0xff]
        %v1436 = vld [vmem:[%s12 + $0x1] sm:$0x1]
        %v1437 = vlaneseq
        %v1438 = vshrl.u32 %v1437, 7
        %v1439 = vsub.s32 0, %v1438
        %v1440 = vrot.slane %v1436, %v1439
        %v1442 = vsel %vm700, %v1429, 0
        %v1445 = vsel %vm700, %v1430, 0
        %1447 = vmatprep.subr.mxu0 0.0
        %1448 = vmatpush1.msra.mxu0 %v1432
        %1449 = vmatprep.subr.mxu0 0.0
        %1450 = vmatpush1.msra.mxu0 %v1433
        %1451 = vmatprep.subr.mxu0 0.0
        %1452 = vmatpush1.msra.mxu0 %v1434
        %1453 = vmatprep.subr.mxu0 0.0
        %1454 = vmatpush1.msra.mxu0 %v1435
        %1455 = vmatprep.subr.mxu0 0.0
        %1456 = vmatpush1.msra.mxu0 0.0
        %1457 = vmatprep.subr.mxu0 0.0
        %1458 = vmatpush1.msra.mxu0 0.0
        %1459 = vmatprep.subr.mxu0 0.0
        %1460 = vmatpush1.msra.mxu0 0.0
        %1461 = vmatprep.subr.mxu0 0.0
        %1462 = vmatpush1.msra.mxu0 0.0
        %1463 = vmatprep.subr.mxu0 0.0
        %1464 = vmatpush1.msra.mxu0 0.0
        %1465 = vmatprep.subr.mxu0 0.0
        %1466 = vmatpush1.msra.mxu0 0.0
        %1467 = vmatprep.subr.mxu0 0.0
        %1468 = vmatpush1.msra.mxu0 0.0
        %1469 = vmatprep.subr.mxu0 0.0
        %1470 = vmatpush1.msra.mxu0 0.0
        %1471 = vmatprep.subr.mxu0 0.0
        %1472 = vmatpush1.msra.mxu0 0.0
        %1473 = vmatprep.subr.mxu0 0.0
        %1474 = vmatpush1.msra.mxu0 0.0
        %1475 = vmatprep.subr.mxu0 0.0
        %1476 = vmatpush1.msra.mxu0 0.0
        %1477 = vmatprep.subr.mxu0 0.0
        %1478 = vmatpush1.msra.mxu0 0.0
        %1479 = vmatprep.subr.mxu0 0.0
        %1480 = vmatpush1.msra.mxu0 0.0
        %1481 = vmatprep.subr.mxu0 0.0
        %1482 = vmatpush1.msra.mxu0 0.0
        %1483 = vmatprep.subr.mxu0 0.0
        %1484 = vmatpush1.msra.mxu0 0.0
        %1485 = vmatprep.subr.mxu0 0.0
        %1486 = vmatpush1.msra.mxu0 0.0
        %1487 = vmatprep.subr.mxu0 0.0
        %1488 = vmatpush1.msra.mxu0 0.0
        %1489 = vmatprep.subr.mxu0 0.0
        %1490 = vmatpush1.msra.mxu0 0.0
        %1491 = vmatprep.subr.mxu0 0.0
        %1492 = vmatpush1.msra.mxu0 0.0
        %1493 = vmatprep.subr.mxu0 0.0
        %1494 = vmatpush1.msra.mxu0 0.0
        %1495 = vmatprep.subr.mxu0 0.0
        %1496 = vmatpush1.msra.mxu0 0.0
        %1497 = vmatprep.subr.mxu0 0.0
        %1498 = vmatpush1.msra.mxu0 0.0
        %1499 = vmatprep.subr.mxu0 0.0
        %1500 = vmatpush1.msra.mxu0 0.0
        %1501 = vmatprep.subr.mxu0 0.0
        %1502 = vmatpush1.msra.mxu0 0.0
        %1503 = vmatprep.subr.mxu0 0.0
        %1504 = vmatpush1.msra.mxu0 0.0
        %1505 = vmatprep.subr.mxu0 0.0
        %1506 = vmatpush1.msra.mxu0 0.0
        %1507 = vmatprep.subr.mxu0 0.0
        %1508 = vmatpush1.msra.mxu0 0.0
        %1509 = vmatprep.subr.mxu0 0.0
        %1510 = vmatpush1.msra.mxu0 0.0
        %1511 = vmatprep.mubr.f32.mxu0 0.0
        %1512 = vmatmul.mubr.f32.gmra.mrb[0].mxu0 %v1442
        %v1513 = vpop.f32.mrb[0].mxu0
        %v1514 = vadd.f32 %v1440, %v1513
        %v1515 = vpop.f32.mrb[0].mxu0
        %1516 = vmatprep.mubr.f32.mxu0 0.0
        %1517 = vmatmul.mubr.f32.gmra.mrb[0].mxu0 %v1445
        %v1518 = vpop.f32.mrb[0].mxu0
        %v1519 = vadd.f32 %v1440, %v1518
        %v1520 = vpop.f32.mrb[0].mxu0
        %1521 = vdwg.mxu0
        %v1522 = vmul.f32 %v1514, 0.5
        %v1523 = vmul.f32 %v1519, 0.5
        %v1524 = vmul.f32 %v1514, 0.70710677
        %v1525 = vmul.f32 %v1519, 0.70710677
        %v1526 = verf.f32.pop %v1524
        %v1527 = verf.f32.pop %v1525
        %v1528 = vadd.f32 %v1526, 1.0
        %v1529 = vadd.f32 %v1527, 1.0
        %v1530 = vmul.f32 %v1522, %v1528
        %v1531 = vmul.f32 %v1523, %v1529
        %s1532 = scalar_lea.vmem %s13, 128
        %v1533 = vld [vmem:[%s1532] sm:$0xff]
        %v1534 = vld [vmem:[%s1532 + $0x8] sm:$0xff]
        %v1535 = vld [vmem:[%s1532 + $0x10] sm:$0xff]
        %v1536 = vld [vmem:[%s1532 + $0x18] sm:$0xff]
        %v1537 = vld [vmem:[%s1532 + $0x20] sm:$0xff]
        %v1538 = vld [vmem:[%s1532 + $0x28] sm:$0xff]
        %v1539 = vld [vmem:[%s1532 + $0x30] sm:$0xff]
        %v1540 = vld [vmem:[%s1532 + $0x38] sm:$0xff]
        %v1541 = vld [vmem:[%s1532 + $0x40] sm:$0xff]
        %v1542 = vld [vmem:[%s1532 + $0x48] sm:$0xff]
        %v1543 = vld [vmem:[%s1532 + $0x50] sm:$0xff]
        %v1544 = vld [vmem:[%s1532 + $0x58] sm:$0xff]
        %v1545 = vld [vmem:[%s1532 + $0x60] sm:$0xff]
        %v1546 = vld [vmem:[%s1532 + $0x68] sm:$0xff]
        %v1547 = vld [vmem:[%s1532 + $0x70] sm:$0xff]
        %v1548 = vld [vmem:[%s1532 + $0x78] sm:$0xff]
        %v1549 = vld [vmem:[%s14 + $0x1] sm:$0x1]
        %v1550 = vlaneseq
        %v1551 = vshrl.u32 %v1550, 7
        %v1552 = vsub.s32 0, %v1551
        %v1553 = vrot.slane %v1549, %v1552
        %1554 = vmatprep.subr.mxu0 0.0
        %1555 = vmatpush1.msra.mxu0 %v1533
        %1556 = vmatprep.subr.mxu0 0.0
        %1557 = vmatpush1.msra.mxu0 %v1534
        %1558 = vmatprep.subr.mxu0 0.0
        %1559 = vmatpush1.msra.mxu0 %v1535
        %1560 = vmatprep.subr.mxu0 0.0
        %1561 = vmatpush1.msra.mxu0 %v1536
        %1562 = vmatprep.subr.mxu0 0.0
        %1563 = vmatpush1.msra.mxu0 %v1537
        %1564 = vmatprep.subr.mxu0 0.0
        %1565 = vmatpush1.msra.mxu0 %v1538
        %1566 = vmatprep.subr.mxu0 0.0
        %1567 = vmatpush1.msra.mxu0 %v1539
        %1568 = vmatprep.subr.mxu0 0.0
        %1569 = vmatpush1.msra.mxu0 %v1540
        %1570 = vmatprep.subr.mxu0 0.0
        %1571 = vmatpush1.msra.mxu0 %v1541
        %1572 = vmatprep.subr.mxu0 0.0
        %1573 = vmatpush1.msra.mxu0 %v1542
        %1574 = vmatprep.subr.mxu0 0.0
        %1575 = vmatpush1.msra.mxu0 %v1543
        %1576 = vmatprep.subr.mxu0 0.0
        %1577 = vmatpush1.msra.mxu0 %v1544
        %1578 = vmatprep.subr.mxu0 0.0
        %1579 = vmatpush1.msra.mxu0 %v1545
        %1580 = vmatprep.subr.mxu0 0.0
        %1581 = vmatpush1.msra.mxu0 %v1546
        %1582 = vmatprep.subr.mxu0 0.0
        %1583 = vmatpush1.msra.mxu0 %v1547
        %1584 = vmatprep.subr.mxu0 0.0
        %1585 = vmatpush1.msra.mxu0 %v1548
        %1586 = vmatprep.subr.mxu0 0.0
        %1587 = vmatpush1.msra.mxu0 0.0
        %1588 = vmatprep.subr.mxu0 0.0
        %1589 = vmatpush1.msra.mxu0 0.0
        %1590 = vmatprep.subr.mxu0 0.0
        %1591 = vmatpush1.msra.mxu0 0.0
        %1592 = vmatprep.subr.mxu0 0.0
        %1593 = vmatpush1.msra.mxu0 0.0
        %1594 = vmatprep.subr.mxu0 0.0
        %1595 = vmatpush1.msra.mxu0 0.0
        %1596 = vmatprep.subr.mxu0 0.0
        %1597 = vmatpush1.msra.mxu0 0.0
        %1598 = vmatprep.subr.mxu0 0.0
        %1599 = vmatpush1.msra.mxu0 0.0
        %1600 = vmatprep.subr.mxu0 0.0
        %1601 = vmatpush1.msra.mxu0 0.0
        %1602 = vmatprep.subr.mxu0 0.0
        %1603 = vmatpush1.msra.mxu0 0.0
        %1604 = vmatprep.subr.mxu0 0.0
        %1605 = vmatpush1.msra.mxu0 0.0
        %1606 = vmatprep.subr.mxu0 0.0
        %1607 = vmatpush1.msra.mxu0 0.0
        %1608 = vmatprep.subr.mxu0 0.0
        %1609 = vmatpush1.msra.mxu0 0.0
        %1610 = vmatprep.subr.mxu0 0.0
        %1611 = vmatpush1.msra.mxu0 0.0
        %1612 = vmatprep.subr.mxu0 0.0
        %1613 = vmatpush1.msra.mxu0 0.0
        %1614 = vmatprep.subr.mxu0 0.0
        %1615 = vmatpush1.msra.mxu0 0.0
        %1616 = vmatprep.subr.mxu0 0.0
        %1617 = vmatpush1.msra.mxu0 0.0
        %1618 = vmatprep.mubr.f32.mxu0 0.0
        %1619 = vmatmul.mubr.f32.gmra.mrb[0].mxu0 %v1530
        %v1620 = vpop.f32.mrb[0].mxu0
        %v1621 = vadd.f32 %v1553, %v1620
        %v1622 = vpop.f32.mrb[0].mxu0
        %1623 = vmatprep.mubr.f32.mxu0 0.0
        %1624 = vmatmul.mubr.f32.gmra.mrb[0].mxu0 %v1531
        %v1625 = vpop.f32.mrb[0].mxu0
        %v1626 = vadd.f32 %v1553, %v1625
        %v1627 = vpop.f32.mrb[0].mxu0
        %1628 = vdwg.mxu0
        %v1629 = vadd.f32 %v1171, %v1621
        %v1630 = vadd.f32 %v1172, %v1626
        %v1631 = vld [vmem:[%s15] sm:$0x1]
        %v1632 = vld [vmem:[%s16] sm:$0x1]
        %v1633 = vsel %vm700, %v1629, 0.0
        %1634 = vadd.xlane.f32.xlu0 %v1633
        %v1635 = vpop.xlane.xlu0 %1634
        %v1636 = vsel %vm700, %v1630, 0.0
        %1637 = vadd.xlane.f32.xlu0 %v1636
        %v1638 = vpop.xlane.xlu0 %1637
        %v1639 = vmul.f32 %v1635, %v707
        %v1640 = vmul.f32 %v1638, %v707
        %v1641 = vsub.f32 %v1629, %v1639
        %v1642 = vsub.f32 %v1630, %v1640
        %v1643 = vmul.f32 %v1641, %v1641
        %v1644 = vmul.f32 %v1642, %v1642
        %v1645 = vsel %vm700, %v1643, 0.0
        %1646 = vadd.xlane.f32.xlu0 %v1645
        %v1647 = vpop.xlane.xlu0 %1646
        %v1648 = vsel %vm700, %v1644, 0.0
        %1649 = vadd.xlane.f32.xlu0 %v1648
        %v1650 = vpop.xlane.xlu0 %1649
        %v1651 = vmul.f32 %v1647, %v707
        %v1652 = vmul.f32 %v1650, %v707
        %v1653 = vadd.f32 %v1651, 1e-06
        %v1654 = vadd.f32 %v1652, 1e-06
        %v1655 = vrsqrt.pop %v1653
        %v1656 = vrsqrt.pop %v1654
        %v1657 = vmul.f32 %v1641, %v1655
        %v1658 = vmul.f32 %v1642, %v1656
        %v1660 = vlaneseq
        %v1661 = vshrl.u32 %v1660, 7
        %v1662 = vsub.s32 0, %v1661
        %v1663 = vrot.slane %v1631, %v1662
        %v1665 = vmul.f32 %v1657, %v1663
        %v1666 = vmul.f32 %v1658, %v1663
        %v1668 = vlaneseq
        %v1669 = vshrl.u32 %v1668, 7
        %v1670 = vsub.s32 0, %v1669
        %v1671 = vrot.slane %v1632, %v1670
        %v1673 = vadd.f32 %v1665, %v1671
        %v1674 = vadd.f32 %v1666, %v1671
        %v1675 = vsel %vm700, %v1673, 0.0
        %v1676 = vsel %vm700, %v1674, 0.0
        %v1677 = vadd.f32 %v1675, %v1676
        %v1678 = vrot.slane %v1677, 4
        %v1679 = vadd.f32 %v1677, %v1678
        %v1680 = vrot.slane %v1679, 2
        %v1681 = vadd.f32 %v1679, %v1680
        %v1682 = vrot.slane %v1681, 1
        %v1683 = vadd.f32 %v1681, %v1682
        %v1684 = vrcp.pop 16.0
        %v1685 = vmul.f32 %v1683, %v1684
        %v1686 = vld [vmem:[%s17] sm:$0xff]
        %v1687 = vld [vmem:[%s17 + $0x8] sm:$0xff]
        %v1688 = vld [vmem:[%s17 + $0x10] sm:$0xff]
        %v1689 = vld [vmem:[%s17 + $0x18] sm:$0xff]
        %v1690 = vld [vmem:[%s18] sm:$0x1]
        %v1692 = vsel %vm700, %v1685, 0
        %1694 = vmatprep.subr.mxu0 0.0
        %1695 = vmatpush1.msra.mxu0 %v1686
        %1696 = vmatprep.subr.mxu0 0.0
        %1697 = vmatpush1.msra.mxu0 %v1687
        %1698 = vmatprep.subr.mxu0 0.0
        %1699 = vmatpush1.msra.mxu0 %v1688
        %1700 = vmatprep.subr.mxu0 0.0
        %1701 = vmatpush1.msra.mxu0 %v1689
        %1702 = vmatprep.subr.mxu0 0.0
        %1703 = vmatpush1.msra.mxu0 0.0
        %1704 = vmatprep.subr.mxu0 0.0
        %1705 = vmatpush1.msra.mxu0 0.0
        %1706 = vmatprep.subr.mxu0 0.0
        %1707 = vmatpush1.msra.mxu0 0.0
        %1708 = vmatprep.subr.mxu0 0.0
        %1709 = vmatpush1.msra.mxu0 0.0
        %1710 = vmatprep.subr.mxu0 0.0
        %1711 = vmatpush1.msra.mxu0 0.0
        %1712 = vmatprep.subr.mxu0 0.0
        %1713 = vmatpush1.msra.mxu0 0.0
        %1714 = vmatprep.subr.mxu0 0.0
        %1715 = vmatpush1.msra.mxu0 0.0
        %1716 = vmatprep.subr.mxu0 0.0
        %1717 = vmatpush1.msra.mxu0 0.0
        %1718 = vmatprep.subr.mxu0 0.0
        %1719 = vmatpush1.msra.mxu0 0.0
        %1720 = vmatprep.subr.mxu0 0.0
        %1721 = vmatpush1.msra.mxu0 0.0
        %1722 = vmatprep.subr.mxu0 0.0
        %1723 = vmatpush1.msra.mxu0 0.0
        %1724 = vmatprep.subr.mxu0 0.0
        %1725 = vmatpush1.msra.mxu0 0.0
        %1726 = vmatprep.subr.mxu0 0.0
        %1727 = vmatpush1.msra.mxu0 0.0
        %1728 = vmatprep.subr.mxu0 0.0
        %1729 = vmatpush1.msra.mxu0 0.0
        %1730 = vmatprep.subr.mxu0 0.0
        %1731 = vmatpush1.msra.mxu0 0.0
        %1732 = vmatprep.subr.mxu0 0.0
        %1733 = vmatpush1.msra.mxu0 0.0
        %1734 = vmatprep.subr.mxu0 0.0
        %1735 = vmatpush1.msra.mxu0 0.0
        %1736 = vmatprep.subr.mxu0 0.0
        %1737 = vmatpush1.msra.mxu0 0.0
        %1738 = vmatprep.subr.mxu0 0.0
        %1739 = vmatpush1.msra.mxu0 0.0
        %1740 = vmatprep.subr.mxu0 0.0
        %1741 = vmatpush1.msra.mxu0 0.0
        %1742 = vmatprep.subr.mxu0 0.0
        %1743 = vmatpush1.msra.mxu0 0.0
        %1744 = vmatprep.subr.mxu0 0.0
        %1745 = vmatpush1.msra.mxu0 0.0
        %1746 = vmatprep.subr.mxu0 0.0
        %1747 = vmatpush1.msra.mxu0 0.0
        %1748 = vmatprep.subr.mxu0 0.0
        %1749 = vmatpush1.msra.mxu0 0.0
        %1750 = vmatprep.subr.mxu0 0.0
        %1751 = vmatpush1.msra.mxu0 0.0
        %1752 = vmatprep.subr.mxu0 0.0
        %1753 = vmatpush1.msra.mxu0 0.0
        %1754 = vmatprep.subr.mxu0 0.0
        %1755 = vmatpush1.msra.mxu0 0.0
        %1756 = vmatprep.subr.mxu0 0.0
        %1757 = vmatpush1.msra.mxu0 0.0
        %1758 = vmatprep.mubr.f32.mxu0 0.0
        %1759 = vmatmul.mubr.f32.gmra.mrb[0].mxu0 %v1692
        %v1760 = vpop.f32.mrb[0].mxu0
        %v1761 = vadd.f32 %v1690, %v1760
        %v1762 = vpop.f32.mrb[0].mxu0
        %1763 = vdwg.mxu0
        %1764 = vst [vmem:[%s594] sm:$0x1] %v1761
        %s1765 = sand.u32 %s445, 1
        %s1766 = scalar_lea.sflag [#allocation3], %s1765
        %s1767 = sand.u32 %s445, 1
        %s1768 = scalar_lea.vmem [#allocation2], %s1767
        // Predicated region
        $region97: #{gfnet_forward.1} parent=95 // pred_check
          %p1769 = pneg %p455
        $region98: #{gfnet_forward.1} parent=95 // pred_check_branch
          %1771 = sbr.rel (%p1769) target = $region100
        $region99: #{gfnet_forward.1} parent=95 // pred_region
          %s1773 = ssub.s32 16, 16
          %1774 = vsyncadd %s1766, %s1773
          %s1775 = smul.addr %s33, 16
          %s1776 = scalar_lea.hbm %s19, %s1775
          %s1778 = sshll.u32 %s1768, 4
          %s1779 = int_to_ptr.vmem [resolvable:$true] %s1778
          %1781 = dma.vmem_to_hbm [thread:$0]  %s1779, 16, %s1776, %s1766
        $region100: #{gfnet_forward.1} parent=95 // pred_fallthru
          _
      $region96: #{gfnet_forward.1} parent=5 // pred_fallthru
        _
      %p1782 = scmp.le.s32.totalorder 2, %s28
      // Predicated region
      $region101: #{gfnet_forward.1} parent=5 // pred_check
        %p1783 = pneg %p1782
      $region102: #{gfnet_forward.1} parent=5 // pred_check_branch
        %1785 = sbr.rel (%p1783) target = $region104
      $region103: #{gfnet_forward.1} parent=5 // pred_region
        %s1786 = ssub.s32 %s28, 2
        // Predicated region
        $region105: #{gfnet_forward.1} parent=103 // pred_check
          %p1787 = pneg %p461
        $region106: #{gfnet_forward.1} parent=103 // pred_check_branch
          %1789 = sbr.rel (%p1787) target = $region108
        $region107: #{gfnet_forward.1} parent=103 // pred_region
          %s1790 = sand.u32 %s446, 1
          %s1791 = scalar_lea.sflag [#allocation3], %s1790
          %s1792 = sand.u32 %s446, 1
          %s1793 = scalar_lea.vmem [#allocation2], %s1792
          %1794 = dma.done %s1791, 16
        $region108: #{gfnet_forward.1} parent=103 // pred_fallthru
          _
      $region104: #{gfnet_forward.1} parent=5 // pred_fallthru
        _
    $region6: #{gfnet_forward.1} parent=1 // loop_footer
      %s32 = sadd.s32 1, %s28
    $region7: #{gfnet_forward.1} parent=1 // loop_footer_branch
      %27 = sbr.rel target = $region3
    $region8: #{gfnet_forward.1} parent=1 // loop_exit
      _
    %1795 = vsyncpa [#allocation3], 1
    %s1796 = scalar_lea.sflag [#allocation3], 1
    %1797 = vsyncpa %s1796, 1

</llo_original>
